<compile_context>
chip_gen: v6e
topology: v6e:2x2x1
jax: 0.10.0
libtpu: 0.0.40
codegen_flags: <defaults>
</compile_context>

<pallas_src>
import functools
import math

import numpy as np
import jax
import jax.numpy as jnp
from jax.experimental import pallas as pl
from jax.experimental.pallas import tpu as pltpu


def _round_up(x, m):
    return ((x + m - 1) // m) * m


def _fused_encoder_kernel(x_ref, w_ref, b_ref, o_ref, act_ref, *,
                          H, W, C, Cpad, Nb, num_convs, coord):
    """Fused coord-conv + num_convs x (3x3 conv + bias + ReLU), Nb images/step.

    x_ref  : (Nb, H, LW)  bf16 inputs, channel-major lanes (lane = c*W + j);
                          lanes >= C*W arrive zero, coord channels added here.
    w_ref  : (num_convs, 3, LW, LW) bf16 banded per-kernel-row weights.
    b_ref  : (num_convs, 1, LW)     f32 bias rows (bias[co] at lane co*W+j).
    o_ref  : (Nb, H, LW)  final activation (lane-dense stores).
    act_ref: (round16(Nb*(H+2)), LW) bf16 VMEM scratch slab.  Image b occupies
             rows [b*(H+2), (b+1)*(H+2)):  row b*(H+2) and row b*(H+2)+H+1 are
             zero halo rows, the H rows in between hold the activation.
    """
    f32 = jnp.float32
    LW = Cpad * W
    S = H + 2                  # per-image stride in the slab
    M = Nb * S - 2             # matmul rows per step (dead seam rows included)

    # Zero the whole scratch: establishes the zero halo rows (and the
    # alignment-padding rows, which are never read but never left stale).
    act_ref[...] = jnp.zeros_like(act_ref)

    # Coordinate channels (identical for every image).  They are ADDED because
    # the wrapper zero-pads all lanes >= C*W.
    if coord:
        lane = jax.lax.broadcasted_iota(jnp.int32, (H, LW), 1)
        row = jax.lax.broadcasted_iota(jnp.int32, (H, LW), 0).astype(f32)
        sx = 2.0 / (H - 1) if H > 1 else 0.0            # linspace(-1, 1, H)
        sy = 2.0 / (W - 1) if W > 1 else 0.0            # linspace(-1, 1, W)
        gx = row * sx - 1.0                              # varies along H
        gy = (lane - (C + 1) * W).astype(f32) * sy - 1.0  # varies along W
        in_x = (lane >= C * W) & (lane < (C + 1) * W)    # channel C
        in_y = (lane >= (C + 1) * W) & (lane < (C + 2) * W)  # channel C+1
        coord_add = jnp.where(in_x, gx, jnp.where(in_y, gy, 0.0))

    # Layer-0 input rows -> interior rows of each image's slab block.
    for b in range(Nb):
        xb = x_ref[b].astype(f32)
        if coord:
            xb = xb + coord_add
        act_ref[b * S + 1: b * S + 1 + H, :] = xb.astype(act_ref.dtype)

    # num_convs x (3x3 conv + bias + ReLU); activations never leave VMEM.
    for l in range(num_convs):
        # f32 accumulator initialized with the broadcast bias row.
        acc = jnp.broadcast_to(b_ref[l], (M, LW))
        for dh in range(3):
            acc = acc + jnp.dot(act_ref[dh: dh + M, :], w_ref[l, dh],
                                preferred_element_type=f32)
        y = jnp.maximum(acc, 0.0)                        # ReLU (f32)
        last = (l == num_convs - 1)
        # Store only the valid rows of each image; the 2 dead seam rows per
        # image (computed from zero halos + next image's first row) are simply
        # dropped, so the zero halo rows in act_ref are never overwritten.
        for b in range(Nb):
            yb = y[b * S: b * S + H, :]
            if last:
                o_ref[b] = yb.astype(o_ref.dtype)        # lane-dense store
            else:
                act_ref[b * S + 1: b * S + 1 + H, :] = yb.astype(act_ref.dtype)


@functools.partial(jax.jit,
                   static_argnames=("conv_dims", "coord", "cpad", "nb"))
def feature_encoder_forward(feat_nchw, w_banded, b_rows, *,
                            conv_dims, coord, cpad, nb):
    """NCHW feat -> fused Pallas encoder head -> NCHW output."""
    N, C, H, W = feat_nchw.shape
    LW = cpad * W
    num_convs = w_banded.shape[0]
    steps = -(-N // nb)                 # ceil
    Np = steps * nb

    # NCHW -> channel-major lane layout (N, H, C*W), bf16; zero-pad lanes to
    # LW and batch to a multiple of nb.  (Tiny one-shot layout prep; a
    # production consumer should keep the lane-dense layout end-to-end.)
    x = jnp.transpose(feat_nchw, (0, 2, 1, 3)).reshape(N, H, C * W)
    x = x.astype(jnp.bfloat16)
    x = jnp.pad(x, ((0, Np - N), (0, 0), (0, LW - C * W)))

    pad_rows = _round_up(nb * (H + 2), 16)   # bf16 sublane tile = 16

    kernel = functools.partial(_fused_encoder_kernel, H=H, W=W, C=C,
                               Cpad=cpad, Nb=nb, num_convs=num_convs,
                               coord=coord)

    out = pl.pallas_call(
        kernel,
        out_shape=jax.ShapeDtypeStruct((Np, H, LW), feat_nchw.dtype),
        grid_spec=pltpu.PrefetchScalarGridSpec(
            num_scalar_prefetch=0,
            grid=(steps,),
            in_specs=[
                pl.BlockSpec((nb, H, LW), lambda s: (s, 0, 0)),
                # Constant index_map -> the pipeline does not re-fetch the
                # banded weights / bias between grid steps.  (For very wide W
                # on v7x, additionally single-buffer these blocks.)
                pl.BlockSpec((num_convs, 3, LW, LW), lambda s: (0, 0, 0, 0)),
                pl.BlockSpec((num_convs, 1, LW), lambda s: (0, 0, 0)),
            ],
            out_specs=pl.BlockSpec((nb, H, LW), lambda s: (s, 0, 0)),
            scratch_shapes=[pltpu.VMEM((pad_rows, LW), jnp.bfloat16)],
        ),
        compiler_params=pltpu.CompilerParams(
            dimension_semantics=("parallel",)),
    )(x, w_banded, b_rows)

    # channel-major lanes -> NCHW (drop batch padding and lane padding)
    y = out[:N, :, :conv_dims * W].reshape(N, H, conv_dims, W)
    return jnp.transpose(y, (0, 2, 1, 3))


def _build_banded_params(weights_hwio, biases, W, cpad):
    """Unroll 3x3 conv weights along width into banded matmul weights (bf16).

    Channel-major lane layout (lane = c*W + j):
        wb[l, dh, ci*W + (j+dw-1), co*W + j] = w_l[dh, dw, ci, co]
    Entries with j+dw-1 outside [0, W) stay zero -> width zero padding happens
    inside the matmul.  Bias is broadcast per output-channel segment (f32).
    """
    num_convs = len(weights_hwio)
    LW = cpad * W
    wb = np.zeros((num_convs, 3, LW, LW), dtype=np.float32)
    bb = np.zeros((num_convs, 1, LW), dtype=np.float32)
    for l, (w, b) in enumerate(zip(weights_hwio, biases)):
        w = np.asarray(w, dtype=np.float32)            # (3, 3, Cin, Cout)
        b = np.asarray(b, dtype=np.float32)            # (Cout,)
        _, _, Cin, Cout = w.shape
        cols = W * np.arange(Cout)
        for dh in range(3):
            for dw in range(3):
                for j in range(W):
                    src = j + dw - 1
                    if 0 <= src < W:
                        for ci in range(Cin):
                            wb[l, dh, ci * W + src, cols + j] = w[dh, dw, ci, :]
        bb[l, 0, :Cout * W] = np.repeat(b, W)
    # bf16 cast: exact zeros stay exactly zero, preserving the halo invariant.
    return jnp.asarray(wb, dtype=jnp.bfloat16), jnp.asarray(bb)


class FeatureEncoderEdgePallas:
    """JAX/Pallas re-implementation of FeatureEncoderEdge (inference path)."""

    def __init__(self, in_channel=4, conv_dims=8, num_convs=3, coord=True,
                 seed=0):
        self.coord = coord
        self.num_convs = num_convs
        self.conv_dims = conv_dims
        self.in_channel = in_channel
        cin0 = in_channel + 2 if coord else in_channel
        self.cpad = max(conv_dims, cin0)

        # Deterministic synthetic parameter init (kaiming-uniform-like bound).
        # Weights stored HWIO == torch OIHW permuted (2, 3, 1, 0).
        key = jax.random.PRNGKey(seed)
        self.weights, self.biases = [], []
        cin = cin0
        for _ in range(num_convs):
            key, kw, kb = jax.random.split(key, 3)
            bound = 1.0 / math.sqrt(cin * 3 * 3)
            w = jax.random.uniform(kw, (3, 3, cin, conv_dims),
                                   minval=-bound, maxval=bound,
                                   dtype=jnp.float32)
            b = jax.random.uniform(kb, (conv_dims,),
                                   minval=-bound, maxval=bound,
                                   dtype=jnp.float32)
            self.weights.append(w)
            self.biases.append(b)
            cin = conv_dims

        self._banded_cache = {}   # keyed by spatial width W

    def _banded(self, W):
        if W not in self._banded_cache:
            self._banded_cache[W] = _build_banded_params(
                self.weights, self.biases, W, self.cpad)
        return self._banded_cache[W]

    @staticmethod
    def _choose_batch(N, H, target_rows=256):
        """Images per grid step: aim for ~256 matmul rows, keep >=2 steps."""
        per = H + 2
        nb = max(1, min(N, target_rows // per))
        steps = -(-N // nb)
        if N >= 2 and steps < 2:
            steps = 2                       # keep both v7x TensorCores busy
        return max(1, -(-N // steps))

    def __call__(self, feat_nchw):
        N, C, H, W = feat_nchw.shape
        assert C == self.in_channel, (C, self.in_channel)
        w_banded, b_rows = self._banded(W)
        nb = self._choose_batch(N, H)
        feat_out = feature_encoder_forward(
            feat_nchw, w_banded, b_rows,
            conv_dims=self.conv_dims, coord=self.coord, cpad=self.cpad, nb=nb)
        # TODO(synk): training-only sigmoid-focal edge loss (sem_loss_on branch)
        # is not computed here; inference returns empty losses like eval mode.
        losses = {}
        return feat_out, losses


def _reference_forward(feat, weights_hwio, biases, coord):
    """Pure-JAX reference matching the PyTorch module (NCHW)."""
    N, C, H, W = feat.shape
    x = feat
    if coord:
        x_pos = jnp.linspace(-1.0, 1.0, H, dtype=feat.dtype)   # over dim -2
        y_pos = jnp.linspace(-1.0, 1.0, W, dtype=feat.dtype)   # over dim -1
        gx = jnp.broadcast_to(x_pos[:, None], (H, W))[None, None]
        gy = jnp.broadcast_to(y_pos[None, :], (H, W))[None, None]
        gx = jnp.broadcast_to(gx, (N, 1, H, W))
        gy = jnp.broadcast_to(gy, (N, 1, H, W))
        x = jnp.concatenate([x, gx, gy], axis=1)
    for w, b in zip(weights_hwio, biases):
        w_oihw = jnp.transpose(w, (3, 2, 0, 1))
        x = jax.lax.conv_general_dilated(
            x, w_oihw, window_strides=(1, 1), padding="SAME",
            dimension_numbers=("NCHW", "OIHW", "NCHW"))
        x = jnp.maximum(x + b[None, :, None, None], 0.0)
    return x


if __name__ == "__main__":
    # Config consistent with the module:
    #   SEMANTIC_FPN.CONVS_DIM (in_channel) = 4
    #   FEATURE_ENCODER.CONVS_DIM = 8, NUM_CONVS = 3, COORD = True,
    #   DEFORM = False, NORM = ''
    N, C, H, W = 2, 4, 16, 16
    feat = jax.random.normal(jax.random.PRNGKey(0), (N, C, H, W),
                             dtype=jnp.float32)

    model = FeatureEncoderEdgePallas(in_channel=C, conv_dims=8, num_convs=3,
                                     coord=True, seed=0)

    # Case 1: N=2 -> 2 grid steps of Nb=1 (megacore-friendly).
    out, losses = model(feat)
    out = jax.block_until_ready(out)
    assert out.shape == (N, 8, H, W), out.shape
    assert bool(jnp.all(out >= 0.0))                 # ReLU output
    ref = _reference_forward(feat, model.weights, model.biases, coord=True)
    err = float(jnp.max(jnp.abs(out - ref)))
    assert err < 5e-2, f"max |pallas - reference| = {err}"

    # Case 2: N=6 -> Nb=3 images batched per slab (exercises dead seam rows).
    feat2 = jax.random.normal(jax.random.PRNGKey(1), (6, C, H, W),
                              dtype=jnp.float32)
    out2, _ = model(feat2)
    out2 = jax.block_until_ready(out2)
    assert out2.shape == (6, 8, H, W), out2.shape
    ref2 = _reference_forward(feat2, model.weights, model.biases, coord=True)
    err2 = float(jnp.max(jnp.abs(out2 - ref2)))
    assert err2 < 5e-2, f"max |pallas - reference| (batched) = {err2}"

    print("KERNEL_OK")
</pallas_src>

<mosaic_0001>
module attributes {stable_mosaic.version = 11 : i64} {
  func.func @_fused_encoder_kernel(%arg0: i32, %arg1: memref<1x16x128xbf16, #tpu.memory_space<vmem>>, %arg2: memref<3x3x128x128xbf16, #tpu.memory_space<vmem>>, %arg3: memref<3x1x128xf32, #tpu.memory_space<vmem>>, %arg4: memref<1x16x128xf32, #tpu.memory_space<vmem>>, %arg5: memref<32x128xbf16, #tpu.memory_space<vmem>>) attributes {dimension_semantics = [#tpu.dimension_semantics<parallel>], iteration_bounds = array<i64: 2>, scalar_prefetch = 0 : i64, scratch_operands = 1 : i64, tpu.core_type = #tpu.core_type<tc>, window_params = [{transform_indices = @transform_0, window_bounds = array<i64: 1, 16, 128>}, {pipeline_mode = #tpu.pipeline_mode<synchronous>, transform_indices = @transform_1, window_bounds = array<i64: 3, 3, 128, 128>}, {pipeline_mode = #tpu.pipeline_mode<synchronous>, transform_indices = @transform_2, window_bounds = array<i64: 3, 1, 128>}, {transform_indices = @transform_3, window_bounds = array<i64: 1, 16, 128>}]} {
    %cst = arith.constant 0.000000e+00 : bf16
    %0 = vector.broadcast %cst : bf16 to vector<32x128xbf16>
    %c0 = arith.constant 0 : index
    %c0_0 = arith.constant 0 : index
    %1 = vector.load %arg5[%c0, %c0_0] : memref<32x128xbf16, #tpu.memory_space<vmem>>, vector<32x128xbf16>
    tpu.vector_store %arg5[%c0, %c0_0], %0 {strides = array<i32>} : memref<32x128xbf16, #tpu.memory_space<vmem>>, vector<32x128xbf16>,
    %2 = tpu.iota {dimensions = array<i32: 1>} : vector<16x128xi32>
    %3 = tpu.iota {dimensions = array<i32: 0>} : vector<16x128xi32>
    %4 = arith.sitofp %3 : vector<16x128xi32> to vector<16x128xf32>
    %cst_1 = arith.constant 0.13333334 : f32
    %5 = vector.broadcast %cst_1 : f32 to vector<16x128xf32>
    %6 = arith.mulf %4, %5 : vector<16x128xf32>
    %cst_2 = arith.constant 1.000000e+00 : f32
    %7 = vector.broadcast %cst_2 : f32 to vector<16x128xf32>
    %8 = arith.subf %6, %7 : vector<16x128xf32>
    %c80_i32 = arith.constant 80 : i32
    %9 = vector.broadcast %c80_i32 : i32 to vector<16x128xi32>
    %10 = arith.subi %2, %9 : vector<16x128xi32>
    %11 = arith.sitofp %10 : vector<16x128xi32> to vector<16x128xf32>
    %cst_3 = arith.constant 0.13333334 : f32
    %12 = vector.broadcast %cst_3 : f32 to vector<16x128xf32>
    %13 = arith.mulf %11, %12 : vector<16x128xf32>
    %cst_4 = arith.constant 1.000000e+00 : f32
    %14 = vector.broadcast %cst_4 : f32 to vector<16x128xf32>
    %15 = arith.subf %13, %14 : vector<16x128xf32>
    %c64_i32 = arith.constant 64 : i32
    %16 = vector.broadcast %c64_i32 : i32 to vector<16x128xi32>
    %17 = arith.cmpi sge, %2, %16 : vector<16x128xi32>
    %c80_i32_5 = arith.constant 80 : i32
    %18 = vector.broadcast %c80_i32_5 : i32 to vector<16x128xi32>
    %19 = arith.cmpi slt, %2, %18 : vector<16x128xi32>
    %20 = arith.andi %17, %19 : vector<16x128xi1>
    %c80_i32_6 = arith.constant 80 : i32
    %21 = vector.broadcast %c80_i32_6 : i32 to vector<16x128xi32>
    %22 = arith.cmpi sge, %2, %21 : vector<16x128xi32>
    %c96_i32 = arith.constant 96 : i32
    %23 = vector.broadcast %c96_i32 : i32 to vector<16x128xi32>
    %24 = arith.cmpi slt, %2, %23 : vector<16x128xi32>
    %25 = arith.andi %22, %24 : vector<16x128xi1>
    %cst_7 = arith.constant 0.000000e+00 : f32
    %26 = vector.broadcast %cst_7 : f32 to vector<16x128xf32>
    %27 = arith.select %25, %15, %26 : vector<16x128xi1>, vector<16x128xf32>
    %28 = arith.select %20, %8, %27 : vector<16x128xi1>, vector<16x128xf32>
    %c0_8 = arith.constant 0 : index
    %c0_9 = arith.constant 0 : index
    %c0_10 = arith.constant 0 : index
    %29 = vector.load %arg1[%c0_8, %c0_9, %c0_10] : memref<1x16x128xbf16, #tpu.memory_space<vmem>>, vector<1x16x128xbf16>
    %30 = vector.shape_cast %29 : vector<1x16x128xbf16> to vector<16x128xbf16>
    %31 = arith.extf %30 : vector<16x128xbf16> to vector<16x128xf32>
    %32 = arith.addf %31, %28 : vector<16x128xf32>
    %33 = arith.truncf %32 : vector<16x128xf32> to vector<16x128xbf16>
    %c1 = arith.constant 1 : index
    %c0_11 = arith.constant 0 : index
    %34 = vector.load %arg5[%c1, %c0_11] : memref<32x128xbf16, #tpu.memory_space<vmem>>, vector<16x128xbf16>
    tpu.vector_store %arg5[%c1, %c0_11], %33 {strides = array<i32>} : memref<32x128xbf16, #tpu.memory_space<vmem>>, vector<16x128xbf16>,
    %c0_12 = arith.constant 0 : index
    %c0_13 = arith.constant 0 : index
    %c0_14 = arith.constant 0 : index
    %35 = vector.load %arg3[%c0_12, %c0_13, %c0_14] : memref<3x1x128xf32, #tpu.memory_space<vmem>>, vector<1x1x128xf32>
    %36 = vector.shape_cast %35 : vector<1x1x128xf32> to vector<1x128xf32>
    %37 = vector.shape_cast %36 : vector<1x128xf32> to vector<1x128xf32>
    %38 = vector.broadcast %37 : vector<1x128xf32> to vector<16x128xf32>
    %c0_15 = arith.constant 0 : index
    %c0_16 = arith.constant 0 : index
    %39 = vector.load %arg5[%c0_15, %c0_16] : memref<32x128xbf16, #tpu.memory_space<vmem>>, vector<16x128xbf16>
    %c0_17 = arith.constant 0 : index
    %c0_18 = arith.constant 0 : index
    %c0_19 = arith.constant 0 : index
    %c0_20 = arith.constant 0 : index
    %40 = vector.load %arg2[%c0_17, %c0_18, %c0_19, %c0_20] : memref<3x3x128x128xbf16, #tpu.memory_space<vmem>>, vector<1x1x128x128xbf16>
    %41 = vector.shape_cast %40 : vector<1x1x128x128xbf16> to vector<128x128xbf16>
    %cst_21 = arith.constant dense<0.000000e+00> : vector<16x128xf32>
    %42 = tpu.matmul %39, %41, %cst_21 {dimension_numbers = #tpu.dot_dimension_numbers<[1], [0], [0], [1], [0, 0, 1, 1], [], []>} : vector<16x128xbf16>, vector<128x128xbf16>, vector<16x128xf32> -> vector<16x128xf32>
    %43 = arith.addf %38, %42 : vector<16x128xf32>
    %c1_22 = arith.constant 1 : index
    %c0_23 = arith.constant 0 : index
    %44 = vector.load %arg5[%c1_22, %c0_23] : memref<32x128xbf16, #tpu.memory_space<vmem>>, vector<16x128xbf16>
    %c0_24 = arith.constant 0 : index
    %c1_25 = arith.constant 1 : index
    %c0_26 = arith.constant 0 : index
    %c0_27 = arith.constant 0 : index
    %45 = vector.load %arg2[%c0_24, %c1_25, %c0_26, %c0_27] : memref<3x3x128x128xbf16, #tpu.memory_space<vmem>>, vector<1x1x128x128xbf16>
    %46 = vector.shape_cast %45 : vector<1x1x128x128xbf16> to vector<128x128xbf16>
    %cst_28 = arith.constant dense<0.000000e+00> : vector<16x128xf32>
    %47 = tpu.matmul %44, %46, %cst_28 {dimension_numbers = #tpu.dot_dimension_numbers<[1], [0], [0], [1], [0, 0, 1, 1], [], []>} : vector<16x128xbf16>, vector<128x128xbf16>, vector<16x128xf32> -> vector<16x128xf32>
    %48 = arith.addf %43, %47 : vector<16x128xf32>
    %c2 = arith.constant 2 : index
    %c0_29 = arith.constant 0 : index
    %49 = vector.load %arg5[%c2, %c0_29] : memref<32x128xbf16, #tpu.memory_space<vmem>>, vector<16x128xbf16>
    %c0_30 = arith.constant 0 : index
    %c2_31 = arith.constant 2 : index
    %c0_32 = arith.constant 0 : index
    %c0_33 = arith.constant 0 : index
    %50 = vector.load %arg2[%c0_30, %c2_31, %c0_32, %c0_33] : memref<3x3x128x128xbf16, #tpu.memory_space<vmem>>, vector<1x1x128x128xbf16>
    %51 = vector.shape_cast %50 : vector<1x1x128x128xbf16> to vector<128x128xbf16>
    %cst_34 = arith.constant dense<0.000000e+00> : vector<16x128xf32>
    %52 = tpu.matmul %49, %51, %cst_34 {dimension_numbers = #tpu.dot_dimension_numbers<[1], [0], [0], [1], [0, 0, 1, 1], [], []>} : vector<16x128xbf16>, vector<128x128xbf16>, vector<16x128xf32> -> vector<16x128xf32>
    %53 = arith.addf %48, %52 : vector<16x128xf32>
    %cst_35 = arith.constant 0.000000e+00 : f32
    %54 = vector.broadcast %cst_35 : f32 to vector<16x128xf32>
    %55 = arith.maximumf %53, %54 : vector<16x128xf32>
    %56 = arith.truncf %55 : vector<16x128xf32> to vector<16x128xbf16>
    %c1_36 = arith.constant 1 : index
    %c0_37 = arith.constant 0 : index
    %57 = vector.load %arg5[%c1_36, %c0_37] : memref<32x128xbf16, #tpu.memory_space<vmem>>, vector<16x128xbf16>
    tpu.vector_store %arg5[%c1_36, %c0_37], %56 {strides = array<i32>} : memref<32x128xbf16, #tpu.memory_space<vmem>>, vector<16x128xbf16>,
    %c1_38 = arith.constant 1 : index
    %c0_39 = arith.constant 0 : index
    %c0_40 = arith.constant 0 : index
    %58 = vector.load %arg3[%c1_38, %c0_39, %c0_40] : memref<3x1x128xf32, #tpu.memory_space<vmem>>, vector<1x1x128xf32>
    %59 = vector.shape_cast %58 : vector<1x1x128xf32> to vector<1x128xf32>
    %60 = vector.shape_cast %59 : vector<1x128xf32> to vector<1x128xf32>
    %61 = vector.broadcast %60 : vector<1x128xf32> to vector<16x128xf32>
    %c0_41 = arith.constant 0 : index
    %c0_42 = arith.constant 0 : index
    %62 = vector.load %arg5[%c0_41, %c0_42] : memref<32x128xbf16, #tpu.memory_space<vmem>>, vector<16x128xbf16>
    %c1_43 = arith.constant 1 : index
    %c0_44 = arith.constant 0 : index
    %c0_45 = arith.constant 0 : index
    %c0_46 = arith.constant 0 : index
    %63 = vector.load %arg2[%c1_43, %c0_44, %c0_45, %c0_46] : memref<3x3x128x128xbf16, #tpu.memory_space<vmem>>, vector<1x1x128x128xbf16>
    %64 = vector.shape_cast %63 : vector<1x1x128x128xbf16> to vector<128x128xbf16>
    %cst_47 = arith.constant dense<0.000000e+00> : vector<16x128xf32>
    %65 = tpu.matmul %62, %64, %cst_47 {dimension_numbers = #tpu.dot_dimension_numbers<[1], [0], [0], [1], [0, 0, 1, 1], [], []>} : vector<16x128xbf16>, vector<128x128xbf16>, vector<16x128xf32> -> vector<16x128xf32>
    %66 = arith.addf %61, %65 : vector<16x128xf32>
    %c1_48 = arith.constant 1 : index
    %c0_49 = arith.constant 0 : index
    %67 = vector.load %arg5[%c1_48, %c0_49] : memref<32x128xbf16, #tpu.memory_space<vmem>>, vector<16x128xbf16>
    %c1_50 = arith.constant 1 : index
    %c1_51 = arith.constant 1 : index
    %c0_52 = arith.constant 0 : index
    %c0_53 = arith.constant 0 : index
    %68 = vector.load %arg2[%c1_50, %c1_51, %c0_52, %c0_53] : memref<3x3x128x128xbf16, #tpu.memory_space<vmem>>, vector<1x1x128x128xbf16>
    %69 = vector.shape_cast %68 : vector<1x1x128x128xbf16> to vector<128x128xbf16>
    %cst_54 = arith.constant dense<0.000000e+00> : vector<16x128xf32>
    %70 = tpu.matmul %67, %69, %cst_54 {dimension_numbers = #tpu.dot_dimension_numbers<[1], [0], [0], [1], [0, 0, 1, 1], [], []>} : vector<16x128xbf16>, vector<128x128xbf16>, vector<16x128xf32> -> vector<16x128xf32>
    %71 = arith.addf %66, %70 : vector<16x128xf32>
    %c2_55 = arith.constant 2 : index
    %c0_56 = arith.constant 0 : index
    %72 = vector.load %arg5[%c2_55, %c0_56] : memref<32x128xbf16, #tpu.memory_space<vmem>>, vector<16x128xbf16>
    %c1_57 = arith.constant 1 : index
    %c2_58 = arith.constant 2 : index
    %c0_59 = arith.constant 0 : index
    %c0_60 = arith.constant 0 : index
    %73 = vector.load %arg2[%c1_57, %c2_58, %c0_59, %c0_60] : memref<3x3x128x128xbf16, #tpu.memory_space<vmem>>, vector<1x1x128x128xbf16>
    %74 = vector.shape_cast %73 : vector<1x1x128x128xbf16> to vector<128x128xbf16>
    %cst_61 = arith.constant dense<0.000000e+00> : vector<16x128xf32>
    %75 = tpu.matmul %72, %74, %cst_61 {dimension_numbers = #tpu.dot_dimension_numbers<[1], [0], [0], [1], [0, 0, 1, 1], [], []>} : vector<16x128xbf16>, vector<128x128xbf16>, vector<16x128xf32> -> vector<16x128xf32>
    %76 = arith.addf %71, %75 : vector<16x128xf32>
    %cst_62 = arith.constant 0.000000e+00 : f32
    %77 = vector.broadcast %cst_62 : f32 to vector<16x128xf32>
    %78 = arith.maximumf %76, %77 : vector<16x128xf32>
    %79 = arith.truncf %78 : vector<16x128xf32> to vector<16x128xbf16>
    %c1_63 = arith.constant 1 : index
    %c0_64 = arith.constant 0 : index
    %80 = vector.load %arg5[%c1_63, %c0_64] : memref<32x128xbf16, #tpu.memory_space<vmem>>, vector<16x128xbf16>
    tpu.vector_store %arg5[%c1_63, %c0_64], %79 {strides = array<i32>} : memref<32x128xbf16, #tpu.memory_space<vmem>>, vector<16x128xbf16>,
    %c2_65 = arith.constant 2 : index
    %c0_66 = arith.constant 0 : index
    %c0_67 = arith.constant 0 : index
    %81 = vector.load %arg3[%c2_65, %c0_66, %c0_67] : memref<3x1x128xf32, #tpu.memory_space<vmem>>, vector<1x1x128xf32>
    %82 = vector.shape_cast %81 : vector<1x1x128xf32> to vector<1x128xf32>
    %83 = vector.shape_cast %82 : vector<1x128xf32> to vector<1x128xf32>
    %84 = vector.broadcast %83 : vector<1x128xf32> to vector<16x128xf32>
    %c0_68 = arith.constant 0 : index
    %c0_69 = arith.constant 0 : index
    %85 = vector.load %arg5[%c0_68, %c0_69] : memref<32x128xbf16, #tpu.memory_space<vmem>>, vector<16x128xbf16>
    %c2_70 = arith.constant 2 : index
    %c0_71 = arith.constant 0 : index
    %c0_72 = arith.constant 0 : index
    %c0_73 = arith.constant 0 : index
    %86 = vector.load %arg2[%c2_70, %c0_71, %c0_72, %c0_73] : memref<3x3x128x128xbf16, #tpu.memory_space<vmem>>, vector<1x1x128x128xbf16>
    %87 = vector.shape_cast %86 : vector<1x1x128x128xbf16> to vector<128x128xbf16>
    %cst_74 = arith.constant dense<0.000000e+00> : vector<16x128xf32>
    %88 = tpu.matmul %85, %87, %cst_74 {dimension_numbers = #tpu.dot_dimension_numbers<[1], [0], [0], [1], [0, 0, 1, 1], [], []>} : vector<16x128xbf16>, vector<128x128xbf16>, vector<16x128xf32> -> vector<16x128xf32>
    %89 = arith.addf %84, %88 : vector<16x128xf32>
    %c1_75 = arith.constant 1 : index
    %c0_76 = arith.constant 0 : index
    %90 = vector.load %arg5[%c1_75, %c0_76] : memref<32x128xbf16, #tpu.memory_space<vmem>>, vector<16x128xbf16>
    %c2_77 = arith.constant 2 : index
    %c1_78 = arith.constant 1 : index
    %c0_79 = arith.constant 0 : index
    %c0_80 = arith.constant 0 : index
    %91 = vector.load %arg2[%c2_77, %c1_78, %c0_79, %c0_80] : memref<3x3x128x128xbf16, #tpu.memory_space<vmem>>, vector<1x1x128x128xbf16>
    %92 = vector.shape_cast %91 : vector<1x1x128x128xbf16> to vector<128x128xbf16>
    %cst_81 = arith.constant dense<0.000000e+00> : vector<16x128xf32>
    %93 = tpu.matmul %90, %92, %cst_81 {dimension_numbers = #tpu.dot_dimension_numbers<[1], [0], [0], [1], [0, 0, 1, 1], [], []>} : vector<16x128xbf16>, vector<128x128xbf16>, vector<16x128xf32> -> vector<16x128xf32>
    %94 = arith.addf %89, %93 : vector<16x128xf32>
    %c2_82 = arith.constant 2 : index
    %c0_83 = arith.constant 0 : index
    %95 = vector.load %arg5[%c2_82, %c0_83] : memref<32x128xbf16, #tpu.memory_space<vmem>>, vector<16x128xbf16>
    %c2_84 = arith.constant 2 : index
    %c2_85 = arith.constant 2 : index
    %c0_86 = arith.constant 0 : index
    %c0_87 = arith.constant 0 : index
    %96 = vector.load %arg2[%c2_84, %c2_85, %c0_86, %c0_87] : memref<3x3x128x128xbf16, #tpu.memory_space<vmem>>, vector<1x1x128x128xbf16>
    %97 = vector.shape_cast %96 : vector<1x1x128x128xbf16> to vector<128x128xbf16>
    %cst_88 = arith.constant dense<0.000000e+00> : vector<16x128xf32>
    %98 = tpu.matmul %95, %97, %cst_88 {dimension_numbers = #tpu.dot_dimension_numbers<[1], [0], [0], [1], [0, 0, 1, 1], [], []>} : vector<16x128xbf16>, vector<128x128xbf16>, vector<16x128xf32> -> vector<16x128xf32>
    %99 = arith.addf %94, %98 : vector<16x128xf32>
    %cst_89 = arith.constant 0.000000e+00 : f32
    %100 = vector.broadcast %cst_89 : f32 to vector<16x128xf32>
    %101 = arith.maximumf %99, %100 : vector<16x128xf32>
    %c0_90 = arith.constant 0 : index
    %c0_91 = arith.constant 0 : index
    %c0_92 = arith.constant 0 : index
    %102 = vector.load %arg4[%c0_90, %c0_91, %c0_92] : memref<1x16x128xf32, #tpu.memory_space<vmem>>, vector<1x16x128xf32>
    %103 = vector.shape_cast %102 : vector<1x16x128xf32> to vector<16x128xf32>
    %104 = vector.shape_cast %101 : vector<16x128xf32> to vector<1x16x128xf32>
    tpu.vector_store %arg4[%c0_90, %c0_91, %c0_92], %104 {strides = array<i32>} : memref<1x16x128xf32, #tpu.memory_space<vmem>>, vector<1x16x128xf32>,
    return
  }
  func.func @transform_0(%arg0: i32) -> (i32, i32, i32) {
    %c0_i32 = arith.constant 0 : i32
    %c0_i32_0 = arith.constant 0 : i32
    %c0_i32_1 = arith.constant 0 : i32
    return %arg0, %c0_i32, %c0_i32_0 : i32, i32, i32
  }
  func.func @transform_1(%arg0: i32) -> (i32, i32, i32, i32) {
    %c0_i32 = arith.constant 0 : i32
    %c0_i32_0 = arith.constant 0 : i32
    %c0_i32_1 = arith.constant 0 : i32
    %c0_i32_2 = arith.constant 0 : i32
    %c0_i32_3 = arith.constant 0 : i32
    return %c0_i32, %c0_i32_0, %c0_i32_1, %c0_i32_2 : i32, i32, i32, i32
  }
  func.func @transform_2(%arg0: i32) -> (i32, i32, i32) {
    %c0_i32 = arith.constant 0 : i32
    %c0_i32_0 = arith.constant 0 : i32
    %c0_i32_1 = arith.constant 0 : i32
    %c0_i32_2 = arith.constant 0 : i32
    return %c0_i32, %c0_i32_0, %c0_i32_1 : i32, i32, i32
  }
  func.func @transform_3(%arg0: i32) -> (i32, i32, i32) {
    %c0_i32 = arith.constant 0 : i32
    %c0_i32_0 = arith.constant 0 : i32
    %c0_i32_1 = arith.constant 0 : i32
    return %arg0, %c0_i32, %c0_i32_0 : i32, i32, i32
  }
}

</mosaic_0001>

<llo_original>
// kernel: feature_encoder_forward.1
$region0: #{feature_encoder_forward.1}
  #allocation0 [shape = 'u32[]', space=smem, size = 0x4, offset = 0x4, fixed_abs, tag = 'smem constant byte address 0x4 - core index']
  #allocation1 [shape = 'u32[144,128]{1,0:T(1,128)}', space=vmem, size = 0x12000, scoped, tag = 'internal scratch']
  #allocation2 [shape = 'bf16[32,128]{1,0:T(8,128)(2,1)}', space=vmem, size = 0x2000, scoped, tag = 'scratch operand']
  %s0 = inlined_call_operand.vmem [shape: bf16[2,16,128], index: 0, kind: input, shape index: {}]
  %s1 = inlined_call_operand.hbm [shape: bf16[3,3,128,128], index: 1, kind: input, shape index: {}]
  %s2 = inlined_call_operand.vmem [shape: f32[3,1,128], index: 2, kind: input, shape index: {}]
  %s3 = inlined_call_operand.vmem [shape: f32[2,16,128], index: 3, kind: output, shape index: {}]
  %s4 = sld [smem:[#allocation0]]
  $region49: #{feature_encoder_forward.1} parent=0
    _
  %s6 = ssub.s32 1, %s4
  %s7 = scalar_select 0, %s6, %s4
  $region1: #{feature_encoder_forward.1} parent=0
    #allocation3 [shape = 'u8[294912]{0}', space=vmem, size = 0x48000, scoped, tag = 'input window, operand 1, single buffered']
    #allocation4 [shape = 's32[2]{0}', space=sflag, size = 0x8, scoped, tag = 'scoped memory for feature_encoder_forward.1']
    %8 = vsyncpa [#allocation4], 0
    loop: start=0, step=1, limit=4
    $region2: #{feature_encoder_forward.1} parent=1 // loop_pre_header
      _
    $region3: #{feature_encoder_forward.1} parent=1 // loop_header
      %s10 = sphi 0, %s14
      %p11 = scmp.ge.s32.totalorder %s10, 4
      %s20 = sphi 0, %s22
      %s23 = sphi 0, %s20
      %s24 = sphi 0, %s23
      %s40 = sphi 0, %s24
      %s44 = sphi 0, %s44
      %s46 = sphi 0, %s44
      %s47 = sphi 0, %s46
      %s61 = sphi 0, %s47
      %s65 = sphi 0, %s65
      %s67 = sphi 0, %s65
      %s68 = sphi 0, %s67
      %s82 = sphi 0, %s68
      %s88 = sphi 0, %s90
      %s91 = sphi 0, %s88
      %s92 = sphi 0, %s91
      %s108 = sphi 0, %s92
    $region4: #{feature_encoder_forward.1} parent=1 // loop_header_branch
      %13 = sbr.rel (%p11) target = $region8
    $region5: #{feature_encoder_forward.1} parent=1 // loop_body
      %s15 = ssub.s32 %s10, 1
      %s16 = ssub.s32 %s10, 2
      %s17 = sadd.s32 %s10, 1
      %s18 = ssub.s32 %s10, %s17
      %p19 = scmp.eq.s32.totalorder %s18, 0
      %s21 = sadd.s32 %s20, 1
      %s22 = scalar_select %p19, %s20, %s21
      %p25 = pneg %p19
      %p26 = scmp.eq.s32.totalorder %s10, 1
      %p27 = por %p25, %p26
      %p28 = scmp.ne.s32.totalorder %s20, %s23
      %p29 = scmp.eq.s32.totalorder %s10, 0
      %p30 = por %p28, %p29
      %p31 = scmp.ne.s32.totalorder %s20, %s23
      %p32 = scmp.eq.s32.totalorder %s15, 1
      %p33 = por %p31, %p32
      %p34 = scmp.ne.s32.totalorder %s23, %s24
      %p35 = scmp.eq.s32.totalorder %s15, 0
      %p36 = por %p34, %p35
      %p37 = scmp.ne.s32.totalorder %s23, %s24
      %p38 = scmp.eq.s32.totalorder %s16, 1
      %p39 = por %p37, %p38
      %p41 = scmp.ne.s32.totalorder %s24, %s40
      %p42 = scmp.eq.s32.totalorder %s16, 0
      %p43 = por %p41, %p42
      %s45 = sadd.s32 %s44, 1
      %p48 = scmp.eq.s32.totalorder %s10, 1
      %p49 = scmp.ne.s32.totalorder %s44, %s46
      %p50 = scmp.eq.s32.totalorder %s10, 0
      %p51 = por %p49, %p50
      %p52 = scmp.ne.s32.totalorder %s44, %s46
      %p53 = scmp.eq.s32.totalorder %s15, 1
      %p54 = por %p52, %p53
      %p55 = scmp.ne.s32.totalorder %s46, %s47
      %p56 = scmp.eq.s32.totalorder %s15, 0
      %p57 = por %p55, %p56
      %p58 = scmp.ne.s32.totalorder %s46, %s47
      %p59 = scmp.eq.s32.totalorder %s16, 1
      %p60 = por %p58, %p59
      %p62 = scmp.ne.s32.totalorder %s47, %s61
      %p63 = scmp.eq.s32.totalorder %s16, 0
      %p64 = por %p62, %p63
      %s66 = sadd.s32 %s65, 1
      %p69 = scmp.eq.s32.totalorder %s10, 1
      %p70 = scmp.ne.s32.totalorder %s65, %s67
      %p71 = scmp.eq.s32.totalorder %s10, 0
      %p72 = por %p70, %p71
      %p73 = scmp.ne.s32.totalorder %s65, %s67
      %p74 = scmp.eq.s32.totalorder %s15, 1
      %p75 = por %p73, %p74
      %p76 = scmp.ne.s32.totalorder %s67, %s68
      %p77 = scmp.eq.s32.totalorder %s15, 0
      %p78 = por %p76, %p77
      %p79 = scmp.ne.s32.totalorder %s67, %s68
      %p80 = scmp.eq.s32.totalorder %s16, 1
      %p81 = por %p79, %p80
      %p83 = scmp.ne.s32.totalorder %s68, %s82
      %p84 = scmp.eq.s32.totalorder %s16, 0
      %p85 = por %p83, %p84
      %s86 = ssub.s32 %s10, %s17
      %p87 = scmp.eq.s32.totalorder %s86, 0
      %s89 = sadd.s32 %s88, 1
      %s90 = scalar_select %p87, %s88, %s89
      %p93 = pneg %p87
      %p94 = scmp.eq.s32.totalorder %s10, 1
      %p95 = por %p93, %p94
      %p96 = scmp.ne.s32.totalorder %s88, %s91
      %p97 = scmp.eq.s32.totalorder %s10, 0
      %p98 = por %p96, %p97
      %p99 = scmp.ne.s32.totalorder %s88, %s91
      %p100 = scmp.eq.s32.totalorder %s15, 1
      %p101 = por %p99, %p100
      %p102 = scmp.ne.s32.totalorder %s91, %s92
      %p103 = scmp.eq.s32.totalorder %s15, 0
      %p104 = por %p102, %p103
      %p105 = scmp.ne.s32.totalorder %s91, %s92
      %p106 = scmp.eq.s32.totalorder %s16, 1
      %p107 = por %p105, %p106
      %p109 = scmp.ne.s32.totalorder %s92, %s108
      %p110 = scmp.eq.s32.totalorder %s16, 0
      %p111 = por %p109, %p110
      %p112 = scmp.le.s32.totalorder 1, %s10
      %p113 = scmp.lt.s32.totalorder %s10, 3
      %p114 = pnand %p112, %p113
      %p115 = pneg %p114
      // Predicated region
      $region9: #{feature_encoder_forward.1} parent=5 // pred_check
        _
      $region10: #{feature_encoder_forward.1} parent=5 // pred_check_branch
        %117 = sbr.rel (%p114) target = $region12
      $region11: #{feature_encoder_forward.1} parent=5 // pred_region
        %s118 = ssub.s32 %s10, 1
        // Predicated region
        $region13: #{feature_encoder_forward.1} parent=11 // pred_check
          %p119 = pneg %p57
        $region14: #{feature_encoder_forward.1} parent=11 // pred_check_branch
          %121 = sbr.rel (%p119) target = $region16
        $region15: #{feature_encoder_forward.1} parent=11 // pred_region
          %s123 = ssub.s32 9216, 9216
          %124 = vsyncadd [#allocation4], %s123
          %s125 = sshll.u32 [#allocation3], 4
          %s126 = int_to_ptr.vmem [resolvable:$true] %s125
          %131 = dma.hbm_to_vmem [thread:$0]  %s1, 9216, %s126, [#allocation4], 64, 64, 4
        $region16: #{feature_encoder_forward.1} parent=11 // pred_fallthru
          _
        // Predicated region
        $region17: #{feature_encoder_forward.1} parent=11 // pred_check
          %p132 = pneg %p78
        $region18: #{feature_encoder_forward.1} parent=11 // pred_check_branch
          %134 = sbr.rel (%p132) target = $region20
        $region19: #{feature_encoder_forward.1} parent=11 // pred_region
          _
        $region20: #{feature_encoder_forward.1} parent=11 // pred_fallthru
          _
      $region12: #{feature_encoder_forward.1} parent=5 // pred_fallthru
        _
      %p135 = scmp.lt.s32.totalorder %s10, 2
      // Predicated region
      $region21: #{feature_encoder_forward.1} parent=5 // pred_check
        %p136 = pneg %p135
      $region22: #{feature_encoder_forward.1} parent=5 // pred_check_branch
        %138 = sbr.rel (%p136) target = $region24
      $region23: #{feature_encoder_forward.1} parent=5 // pred_region
        // Predicated region
        $region25: #{feature_encoder_forward.1} parent=23 // pred_check
          %p139 = pneg %p30
        $region26: #{feature_encoder_forward.1} parent=23 // pred_check_branch
          %141 = sbr.rel (%p139) target = $region28
        $region27: #{feature_encoder_forward.1} parent=23 // pred_region
          %p142 = scmp.lt.s32.totalorder %s10, 1
          %s143 = scalar_select %p142, %s10, 1
          %s144 = smul.addr %s143, 2
          %s145 = smul.addr %s144, 4
          %s146 = scalar_lea.vmem %s0, %s145
        $region28: #{feature_encoder_forward.1} parent=23 // pred_fallthru
          _
      $region24: #{feature_encoder_forward.1} parent=5 // pred_fallthru
        _
      %p147 = scmp.le.s32.totalorder 1, %s10
      %p148 = scmp.lt.s32.totalorder %s10, 3
      %p149 = pnand %p147, %p148
      %p150 = pneg %p149
      // Predicated region
      $region29: #{feature_encoder_forward.1} parent=5 // pred_check
        _
      $region30: #{feature_encoder_forward.1} parent=5 // pred_check_branch
        %152 = sbr.rel (%p149) target = $region32
      $region31: #{feature_encoder_forward.1} parent=5 // pred_region
        %s153 = ssub.s32 %s10, 1
        // Predicated region
        $region33: #{feature_encoder_forward.1} parent=31 // pred_check
          %p154 = pneg %p57
        $region34: #{feature_encoder_forward.1} parent=31 // pred_check_branch
          %156 = sbr.rel (%p154) target = $region36
        $region35: #{feature_encoder_forward.1} parent=31 // pred_region
          %157 = dma.done [#allocation4], 9216
        $region36: #{feature_encoder_forward.1} parent=31 // pred_fallthru
          _
        %p158 = scmp.lt.s32.totalorder %s15, 1
        %s159 = scalar_select %p158, %s15, 1
        %s160 = smul.addr %s159, 2
        %s161 = smul.addr %s160, 4
        %s162 = scalar_lea.vmem %s0, %s161
        %p163 = pneg %p36
        %p164 = pneg %p33
        %p165 = pneg %p57
        %p166 = pneg %p54
        %p167 = pneg %p78
        %p168 = pneg %p75
        %p169 = pneg %p104
        %p170 = pneg %p101
        %p171 = scmp.lt.s32.totalorder %s15, 1
        %s172 = scalar_select %p171, %s15, 1
        %s173 = smul.addr %s172, 2
        %s174 = smul.addr %s173, 8
        %s175 = scalar_lea.vmem %s3, %s174
        %p176 = scmp.lt.s32.totalorder %s15, 1
        %s177 = scalar_select %p176, %s15, 1
        %s178 = smul.addr %s177, 2
        %s179 = smul.addr %s178, 4
        %s180 = scalar_lea.vmem %s0, %s179
        %p181 = scmp.lt.s32.totalorder %s15, 1
        %s182 = scalar_select %p181, %s15, 1
        %s183 = smul.addr %s182, 2
        %s184 = smul.addr %s183, 8
        %s185 = scalar_lea.vmem %s3, %s184
        %187 = vst [vmem:[#allocation2] sm:$0xf] 0
        %188 = vst [vmem:[#allocation2 + $0x4] sm:$0xf] 0
        %189 = vst [vmem:[#allocation2 + $0x8] sm:$0xf] 0
        %190 = vst [vmem:[#allocation2 + $0xc] sm:$0xf] 0
        %v191 = vlaneseq
        %v192 = vand.u32 %v191, 127
        %v193 = vlaneseq
        %v194 = vshrl.u32 %v193, 7
        %v195 = vadd.s32 %v194, 8
        %v196 = vcvt.s32.f32 %v194
        %v197 = vcvt.s32.f32 %v195
        %v198 = vmul.f32 %v196, 0.13333334
        %v199 = vmul.f32 %v197, 0.13333334
        %v200 = vsub.f32 %v198, 1.0
        %v201 = vsub.f32 %v199, 1.0
        %v202 = vsub.s32 %v192, 80
        %v203 = vcvt.s32.f32 %v202
        %v204 = vmul.f32 %v203, 0.13333334
        %v205 = vsub.f32 %v204, 1.0
        %vm206 = vcmp.ge.s32.totalorder %v192, 64
        %vm207 = vcmp.lt.s32.totalorder %v192, 80
        %vm208 = vmand %vm206, %vm207
        %vm209 = vcmp.ge.s32.totalorder %v192, 80
        %vm210 = vcmp.lt.s32.totalorder %v192, 96
        %vm211 = vmand %vm209, %vm210
        %v212 = vsel %vm211, %v205, 0.0
        %v213 = vsel %vm208, %v200, %v212
        %v214 = vsel %vm208, %v201, %v212
        %v215 = vld [vmem:[%s180] sm:$0xf]
        %v216 = vld [vmem:[%s180 + $0x4] sm:$0xf]
        %v217 = vunpack.c.l.bf16 %v215
        %v218 = vunpack.c.l.bf16 %v216
        %v219 = vadd.f32 %v217, %v213
        %v220 = vadd.f32 %v218, %v214
        %v221 = vpack.c.bf16 %v220, %v219
        %v223 = vunpack.c.l.b16 %v221
        %v224 = vunpack.c.h.b16 %v221
        %v225 = vpack.c.b16 %v223, %v223
        %v226 = vpack.c.b16 %v224, %v224
        %vm227 = vsmask.f32 256
        %vm228 = vsmask.f32 4368
        %vm229 = vmor %vm227, %vm228
        %v231 = vshrl.u32 %v225, 16
        %v233 = vrot.slane %v231, 7
        %v234 = vshll.u32 %v225, 16
        %v236 = vor.u32 %v233, %v234
        %v237 = vrot.slane %v233, 4
        %v239 = vshrl.u32 %v226, 16
        %v241 = vrot.slane %v239, 7
        %v242 = vshll.u32 %v226, 16
        %v244 = vor.u32 %v241, %v242
        %v245 = vsel %vm229, %v237, %v244
        %v246 = vrot.slane %v241, 4
        %vm250 = vcmask 1043456
        %vm251 = vsmask.f32 7938
        %vm252 = vmand %vm250, %vm251
        %v253 = vld [vmem:[#allocation2] sm:$0xf]
        %v254 = vsel %vm252, %v236, %v253
        %255 = vst [vmem:[#allocation2] sm:$0xf] %v254
        %256 = vst [vmem:[#allocation2 + $0x4] sm:$0xf] %v245
        %vm257 = vcmask 1040384
        %vm258 = vmand %vm257, %vm227
        %v259 = vld [vmem:[#allocation2 + $0x8] sm:$0x1]
        %v260 = vsel %vm258, %v246, %v259
        %261 = vst [vmem:[#allocation2 + $0x8] sm:$0x1] %v260
        %v262 = vld [vmem:[%s2] sm:$0x1]
        %v264 = vlaneseq
        %v265 = vshrl.u32 %v264, 7
        %v266 = vsub.s32 0, %v265
        %v267 = vrot.slane %v262, %v266
        %v269 = vld [vmem:[#allocation2] sm:$0xf]
        %v270 = vld [vmem:[#allocation2 + $0x4] sm:$0xf]
        %v271 = vld [vmem:[#allocation3] sm:$0xf]
        %v272 = vld [vmem:[#allocation3 + $0x4] sm:$0xf]
        %v273 = vld [vmem:[#allocation3 + $0x8] sm:$0xf]
        %v274 = vld [vmem:[#allocation3 + $0xc] sm:$0xf]
        %v275 = vld [vmem:[#allocation3 + $0x10] sm:$0xf]
        %v276 = vld [vmem:[#allocation3 + $0x14] sm:$0xf]
        %v277 = vld [vmem:[#allocation3 + $0x18] sm:$0xf]
        %v278 = vld [vmem:[#allocation3 + $0x1c] sm:$0xf]
        %v279 = vld [vmem:[#allocation3 + $0x20] sm:$0xf]
        %v280 = vld [vmem:[#allocation3 + $0x24] sm:$0xf]
        %v281 = vld [vmem:[#allocation3 + $0x28] sm:$0xf]
        %v282 = vld [vmem:[#allocation3 + $0x2c] sm:$0xf]
        %v283 = vld [vmem:[#allocation3 + $0x30] sm:$0xf]
        %v284 = vld [vmem:[#allocation3 + $0x34] sm:$0xf]
        %v285 = vld [vmem:[#allocation3 + $0x38] sm:$0xf]
        %v286 = vld [vmem:[#allocation3 + $0x3c] sm:$0xf]
        %v289 = vunpack.c.l.b16 %v269
        %v290 = vunpack.c.l.b16 %v270
        %v291 = vpack.c.b16 %v290, %v289
        %v309 = vunpack.c.l.b16 %v271
        %v310 = vunpack.c.l.b16 %v272
        %v311 = vunpack.c.l.b16 %v273
        %v312 = vunpack.c.l.b16 %v274
        %v313 = vunpack.c.l.b16 %v275
        %v314 = vunpack.c.l.b16 %v276
        %v315 = vunpack.c.l.b16 %v277
        %v316 = vunpack.c.l.b16 %v278
        %v317 = vunpack.c.l.b16 %v279
        %v318 = vunpack.c.l.b16 %v280
        %v319 = vunpack.c.l.b16 %v281
        %v320 = vunpack.c.l.b16 %v282
        %v321 = vunpack.c.l.b16 %v283
        %v322 = vunpack.c.l.b16 %v284
        %v323 = vunpack.c.l.b16 %v285
        %v324 = vunpack.c.l.b16 %v286
        %v325 = vpack.c.b16 %v310, %v309
        %v326 = vpack.c.b16 %v312, %v311
        %v327 = vpack.c.b16 %v314, %v313
        %v328 = vpack.c.b16 %v316, %v315
        %v329 = vpack.c.b16 %v318, %v317
        %v330 = vpack.c.b16 %v320, %v319
        %v331 = vpack.c.b16 %v322, %v321
        %v332 = vpack.c.b16 %v324, %v323
        %341 = vmatprep.subr.bf16.mxu0 0
        %342 = vmatpush1.bf16.msra.mxu0 %v332
        %343 = vmatprep.subr.bf16.mxu0 0
        %344 = vmatpush1.bf16.msra.mxu0 %v331
        %345 = vmatprep.subr.bf16.mxu0 0
        %346 = vmatpush1.bf16.msra.mxu0 %v330
        %347 = vmatprep.subr.bf16.mxu0 0
        %348 = vmatpush1.bf16.msra.mxu0 %v329
        %349 = vmatprep.subr.bf16.mxu0 0
        %350 = vmatpush1.bf16.msra.mxu0 %v328
        %351 = vmatprep.subr.bf16.mxu0 0
        %352 = vmatpush1.bf16.msra.mxu0 %v327
        %353 = vmatprep.subr.bf16.mxu0 0
        %354 = vmatpush1.bf16.msra.mxu0 %v326
        %355 = vmatprep.subr.bf16.mxu0 0
        %356 = vmatpush1.bf16.msra.mxu0 %v325
        %357 = vmatprep.subr.bf16.mxu0 0
        %358 = vmatpush2.bf16.msra.mxu0 0
        %359 = vmatprep.subr.bf16.mxu0 0
        %360 = vmatpush2.bf16.msra.mxu0 0
        %361 = vmatprep.subr.bf16.mxu0 0
        %362 = vmatpush2.bf16.msra.mxu0 0
        %363 = vmatprep.subr.bf16.mxu0 0
        %364 = vmatpush2.bf16.msra.mxu0 0
        %365 = vmatprep.subr.bf16.mxu0 0
        %366 = vmatpush2.bf16.msra.mxu0 0
        %367 = vmatprep.subr.bf16.mxu0 0
        %368 = vmatpush2.bf16.msra.mxu0 0
        %369 = vmatprep.subr.bf16.mxu0 0
        %370 = vmatpush2.bf16.msra.mxu0 0
        %371 = vmatprep.subr.bf16.mxu0 0
        %372 = vmatpush2.bf16.msra.mxu0 0
        %373 = vmatprep.mubr.bf16.mxu0 0
        %374 = vmatmul.mubr.bf16.gmra.mxu0 %v291
        %v375 = vpop.f32.mrf.mxu0
        %v376 = vadd.f32 0.0, %v375
        %v377 = vpop.f32.mrf.mxu0
        %v378 = vpop.f32.mrf.mxu0
        %v379 = vadd.f32 0.0, %v378
        %v380 = vpop.f32.mrf.mxu0
        %381 = vdwg.mxu0
        %v382 = vadd.f32 %v267, %v376
        %v383 = vadd.f32 %v267, %v379
        %v384 = vld [vmem:[#allocation2] sm:$0xf]
        %v385 = vld [vmem:[#allocation2 + $0x4] sm:$0xf]
        %v386 = vld [vmem:[#allocation2 + $0x8] sm:$0x1]
        %s387 = scalar_lea.vmem [#allocation3], 64
        %v388 = vld [vmem:[%s387] sm:$0xf]
        %v389 = vld [vmem:[%s387 + $0x4] sm:$0xf]
        %v390 = vld [vmem:[%s387 + $0x8] sm:$0xf]
        %v391 = vld [vmem:[%s387 + $0xc] sm:$0xf]
        %v392 = vld [vmem:[%s387 + $0x10] sm:$0xf]
        %v393 = vld [vmem:[%s387 + $0x14] sm:$0xf]
        %v394 = vld [vmem:[%s387 + $0x18] sm:$0xf]
        %v395 = vld [vmem:[%s387 + $0x1c] sm:$0xf]
        %v396 = vld [vmem:[%s387 + $0x20] sm:$0xf]
        %v397 = vld [vmem:[%s387 + $0x24] sm:$0xf]
        %v398 = vld [vmem:[%s387 + $0x28] sm:$0xf]
        %v399 = vld [vmem:[%s387 + $0x2c] sm:$0xf]
        %v400 = vld [vmem:[%s387 + $0x30] sm:$0xf]
        %v401 = vld [vmem:[%s387 + $0x34] sm:$0xf]
        %v402 = vld [vmem:[%s387 + $0x38] sm:$0xf]
        %v403 = vld [vmem:[%s387 + $0x3c] sm:$0xf]
        %v407 = vunpack.c.l.b16 %v384
        %v408 = vunpack.c.l.b16 %v385
        %v409 = vunpack.c.l.b16 %v386
        %v410 = vpack.c.b16 %v408, %v407
        %v411 = vpack.c.b16 %v409, %v409
        %vm412 = vsmask.f32 7424
        %v414 = vshrl.u32 %v410, 16
        %v416 = vshll.u32 %v410, 16
        %v418 = vrot.slane %v416, 1
        %v419 = vor.u32 %v414, %v418
        %v421 = vshll.u32 %v411, 16
        %v423 = vrot.slane %v421, 1
        %v424 = vsel %vm412, %v419, %v423
        %v442 = vunpack.c.l.b16 %v388
        %v443 = vunpack.c.l.b16 %v389
        %v444 = vunpack.c.l.b16 %v390
        %v445 = vunpack.c.l.b16 %v391
        %v446 = vunpack.c.l.b16 %v392
        %v447 = vunpack.c.l.b16 %v393
        %v448 = vunpack.c.l.b16 %v394
        %v449 = vunpack.c.l.b16 %v395
        %v450 = vunpack.c.l.b16 %v396
        %v451 = vunpack.c.l.b16 %v397
        %v452 = vunpack.c.l.b16 %v398
        %v453 = vunpack.c.l.b16 %v399
        %v454 = vunpack.c.l.b16 %v400
        %v455 = vunpack.c.l.b16 %v401
        %v456 = vunpack.c.l.b16 %v402
        %v457 = vunpack.c.l.b16 %v403
        %v458 = vpack.c.b16 %v443, %v442
        %v459 = vpack.c.b16 %v445, %v444
        %v460 = vpack.c.b16 %v447, %v446
        %v461 = vpack.c.b16 %v449, %v448
        %v462 = vpack.c.b16 %v451, %v450
        %v463 = vpack.c.b16 %v453, %v452
        %v464 = vpack.c.b16 %v455, %v454
        %v465 = vpack.c.b16 %v457, %v456
        %474 = vmatprep.subr.bf16.mxu0 0
        %475 = vmatpush1.bf16.msra.mxu0 %v465
        %476 = vmatprep.subr.bf16.mxu0 0
        %477 = vmatpush1.bf16.msra.mxu0 %v464
        %478 = vmatprep.subr.bf16.mxu0 0
        %479 = vmatpush1.bf16.msra.mxu0 %v463
        %480 = vmatprep.subr.bf16.mxu0 0
        %481 = vmatpush1.bf16.msra.mxu0 %v462
        %482 = vmatprep.subr.bf16.mxu0 0
        %483 = vmatpush1.bf16.msra.mxu0 %v461
        %484 = vmatprep.subr.bf16.mxu0 0
        %485 = vmatpush1.bf16.msra.mxu0 %v460
        %486 = vmatprep.subr.bf16.mxu0 0
        %487 = vmatpush1.bf16.msra.mxu0 %v459
        %488 = vmatprep.subr.bf16.mxu0 0
        %489 = vmatpush1.bf16.msra.mxu0 %v458
        %490 = vmatprep.subr.bf16.mxu0 0
        %491 = vmatpush2.bf16.msra.mxu0 0
        %492 = vmatprep.subr.bf16.mxu0 0
        %493 = vmatpush2.bf16.msra.mxu0 0
        %494 = vmatprep.subr.bf16.mxu0 0
        %495 = vmatpush2.bf16.msra.mxu0 0
        %496 = vmatprep.subr.bf16.mxu0 0
        %497 = vmatpush2.bf16.msra.mxu0 0
        %498 = vmatprep.subr.bf16.mxu0 0
        %499 = vmatpush2.bf16.msra.mxu0 0
        %500 = vmatprep.subr.bf16.mxu0 0
        %501 = vmatpush2.bf16.msra.mxu0 0
        %502 = vmatprep.subr.bf16.mxu0 0
        %503 = vmatpush2.bf16.msra.mxu0 0
        %504 = vmatprep.subr.bf16.mxu0 0
        %505 = vmatpush2.bf16.msra.mxu0 0
        %506 = vmatprep.mubr.bf16.mxu0 0
        %507 = vmatmul.mubr.bf16.gmra.mxu0 %v424
        %v508 = vpop.f32.mrf.mxu0
        %v509 = vadd.f32 0.0, %v508
        %v510 = vpop.f32.mrf.mxu0
        %v511 = vpop.f32.mrf.mxu0
        %v512 = vadd.f32 0.0, %v511
        %v513 = vpop.f32.mrf.mxu0
        %514 = vdwg.mxu0
        %v515 = vadd.f32 %v382, %v509
        %v516 = vadd.f32 %v383, %v512
        %v517 = vld [vmem:[#allocation2] sm:$0xe]
        %s518 = scalar_lea.vmem [#allocation3], 128
        %v519 = vld [vmem:[%s518] sm:$0xf]
        %v520 = vld [vmem:[%s518 + $0x4] sm:$0xf]
        %v521 = vld [vmem:[%s518 + $0x8] sm:$0xf]
        %v522 = vld [vmem:[%s518 + $0xc] sm:$0xf]
        %v523 = vld [vmem:[%s518 + $0x10] sm:$0xf]
        %v524 = vld [vmem:[%s518 + $0x14] sm:$0xf]
        %v525 = vld [vmem:[%s518 + $0x18] sm:$0xf]
        %v526 = vld [vmem:[%s518 + $0x1c] sm:$0xf]
        %v527 = vld [vmem:[%s518 + $0x20] sm:$0xf]
        %v528 = vld [vmem:[%s518 + $0x24] sm:$0xf]
        %v529 = vld [vmem:[%s518 + $0x28] sm:$0xf]
        %v530 = vld [vmem:[%s518 + $0x2c] sm:$0xf]
        %v531 = vld [vmem:[%s518 + $0x30] sm:$0xf]
        %v532 = vld [vmem:[%s518 + $0x34] sm:$0xf]
        %v533 = vld [vmem:[%s518 + $0x38] sm:$0xf]
        %v534 = vld [vmem:[%s518 + $0x3c] sm:$0xf]
        %v536 = vunpack.c.l.b16 %v517
        %v537 = vpack.c.b16 %v408, %v536
        %vm538 = vcmask 1046528
        %v539 = vrot.slane %v537, 1
        %v540 = vrot.slane %v411, 1
        %v541 = vsel %vm538, %v539, %v540
        %v559 = vunpack.c.l.b16 %v519
        %v560 = vunpack.c.l.b16 %v520
        %v561 = vunpack.c.l.b16 %v521
        %v562 = vunpack.c.l.b16 %v522
        %v563 = vunpack.c.l.b16 %v523
        %v564 = vunpack.c.l.b16 %v524
        %v565 = vunpack.c.l.b16 %v525
        %v566 = vunpack.c.l.b16 %v526
        %v567 = vunpack.c.l.b16 %v527
        %v568 = vunpack.c.l.b16 %v528
        %v569 = vunpack.c.l.b16 %v529
        %v570 = vunpack.c.l.b16 %v530
        %v571 = vunpack.c.l.b16 %v531
        %v572 = vunpack.c.l.b16 %v532
        %v573 = vunpack.c.l.b16 %v533
        %v574 = vunpack.c.l.b16 %v534
        %v575 = vpack.c.b16 %v560, %v559
        %v576 = vpack.c.b16 %v562, %v561
        %v577 = vpack.c.b16 %v564, %v563
        %v578 = vpack.c.b16 %v566, %v565
        %v579 = vpack.c.b16 %v568, %v567
        %v580 = vpack.c.b16 %v570, %v569
        %v581 = vpack.c.b16 %v572, %v571
        %v582 = vpack.c.b16 %v574, %v573
        %591 = vmatprep.subr.bf16.mxu0 0
        %592 = vmatpush1.bf16.msra.mxu0 %v582
        %593 = vmatprep.subr.bf16.mxu0 0
        %594 = vmatpush1.bf16.msra.mxu0 %v581
        %595 = vmatprep.subr.bf16.mxu0 0
        %596 = vmatpush1.bf16.msra.mxu0 %v580
        %597 = vmatprep.subr.bf16.mxu0 0
        %598 = vmatpush1.bf16.msra.mxu0 %v579
        %599 = vmatprep.subr.bf16.mxu0 0
        %600 = vmatpush1.bf16.msra.mxu0 %v578
        %601 = vmatprep.subr.bf16.mxu0 0
        %602 = vmatpush1.bf16.msra.mxu0 %v577
        %603 = vmatprep.subr.bf16.mxu0 0
        %604 = vmatpush1.bf16.msra.mxu0 %v576
        %605 = vmatprep.subr.bf16.mxu0 0
        %606 = vmatpush1.bf16.msra.mxu0 %v575
        %607 = vmatprep.subr.bf16.mxu0 0
        %608 = vmatpush2.bf16.msra.mxu0 0
        %609 = vmatprep.subr.bf16.mxu0 0
        %610 = vmatpush2.bf16.msra.mxu0 0
        %611 = vmatprep.subr.bf16.mxu0 0
        %612 = vmatpush2.bf16.msra.mxu0 0
        %613 = vmatprep.subr.bf16.mxu0 0
        %614 = vmatpush2.bf16.msra.mxu0 0
        %615 = vmatprep.subr.bf16.mxu0 0
        %616 = vmatpush2.bf16.msra.mxu0 0
        %617 = vmatprep.subr.bf16.mxu0 0
        %618 = vmatpush2.bf16.msra.mxu0 0
        %619 = vmatprep.subr.bf16.mxu0 0
        %620 = vmatpush2.bf16.msra.mxu0 0
        %621 = vmatprep.subr.bf16.mxu0 0
        %622 = vmatpush2.bf16.msra.mxu0 0
        %623 = vmatprep.mubr.bf16.mxu0 0
        %624 = vmatmul.mubr.bf16.gmra.mxu0 %v541
        %v625 = vpop.f32.mrf.mxu0
        %v626 = vadd.f32 0.0, %v625
        %v627 = vpop.f32.mrf.mxu0
        %v628 = vpop.f32.mrf.mxu0
        %v629 = vadd.f32 0.0, %v628
        %v630 = vpop.f32.mrf.mxu0
        %631 = vdwg.mxu0
        %v632 = vadd.f32 %v515, %v626
        %v633 = vadd.f32 %v516, %v629
        %v634 = vmax.f32 %v632, 0.0
        %v635 = vmax.f32 %v633, 0.0
        %v636 = vpack.c.bf16 %v635, %v634
        %v638 = vunpack.c.l.b16 %v636
        %v639 = vunpack.c.h.b16 %v636
        %v640 = vpack.c.b16 %v638, %v638
        %v641 = vpack.c.b16 %v639, %v639
        %v643 = vshrl.u32 %v640, 16
        %v645 = vrot.slane %v643, 7
        %v646 = vshll.u32 %v640, 16
        %v648 = vor.u32 %v645, %v646
        %v649 = vrot.slane %v645, 4
        %v651 = vshrl.u32 %v641, 16
        %v653 = vrot.slane %v651, 7
        %v654 = vshll.u32 %v641, 16
        %v656 = vor.u32 %v653, %v654
        %v657 = vsel %vm229, %v649, %v656
        %v658 = vrot.slane %v653, 4
        %v662 = vsel %vm252, %v648, %v384
        %663 = vst [vmem:[#allocation2] sm:$0xf] %v662
        %664 = vst [vmem:[#allocation2 + $0x4] sm:$0xf] %v657
        %v665 = vld [vmem:[#allocation2 + $0x8] sm:$0x1]
        %v666 = vsel %vm258, %v658, %v665
        %667 = vst [vmem:[#allocation2 + $0x8] sm:$0x1] %v666
        %s668 = scalar_lea.vmem %s2, 1
        %v669 = vld [vmem:[%s668] sm:$0x1]
        %v671 = vlaneseq
        %v672 = vshrl.u32 %v671, 7
        %v673 = vsub.s32 0, %v672
        %v674 = vrot.slane %v669, %v673
        %v676 = vld [vmem:[#allocation2] sm:$0xf]
        %v677 = vld [vmem:[#allocation2 + $0x4] sm:$0xf]
        %s678 = scalar_lea.vmem [#allocation3], 192
        %v679 = vld [vmem:[%s678] sm:$0xf]
        %v680 = vld [vmem:[%s678 + $0x4] sm:$0xf]
        %v681 = vld [vmem:[%s678 + $0x8] sm:$0xf]
        %v682 = vld [vmem:[%s678 + $0xc] sm:$0xf]
        %v683 = vld [vmem:[%s678 + $0x10] sm:$0xf]
        %v684 = vld [vmem:[%s678 + $0x14] sm:$0xf]
        %v685 = vld [vmem:[%s678 + $0x18] sm:$0xf]
        %v686 = vld [vmem:[%s678 + $0x1c] sm:$0xf]
        %v687 = vld [vmem:[%s678 + $0x20] sm:$0xf]
        %v688 = vld [vmem:[%s678 + $0x24] sm:$0xf]
        %v689 = vld [vmem:[%s678 + $0x28] sm:$0xf]
        %v690 = vld [vmem:[%s678 + $0x2c] sm:$0xf]
        %v691 = vld [vmem:[%s678 + $0x30] sm:$0xf]
        %v692 = vld [vmem:[%s678 + $0x34] sm:$0xf]
        %v693 = vld [vmem:[%s678 + $0x38] sm:$0xf]
        %v694 = vld [vmem:[%s678 + $0x3c] sm:$0xf]
        %v697 = vunpack.c.l.b16 %v676
        %v698 = vunpack.c.l.b16 %v677
        %v699 = vpack.c.b16 %v698, %v697
        %v717 = vunpack.c.l.b16 %v679
        %v718 = vunpack.c.l.b16 %v680
        %v719 = vunpack.c.l.b16 %v681
        %v720 = vunpack.c.l.b16 %v682
        %v721 = vunpack.c.l.b16 %v683
        %v722 = vunpack.c.l.b16 %v684
        %v723 = vunpack.c.l.b16 %v685
        %v724 = vunpack.c.l.b16 %v686
        %v725 = vunpack.c.l.b16 %v687
        %v726 = vunpack.c.l.b16 %v688
        %v727 = vunpack.c.l.b16 %v689
        %v728 = vunpack.c.l.b16 %v690
        %v729 = vunpack.c.l.b16 %v691
        %v730 = vunpack.c.l.b16 %v692
        %v731 = vunpack.c.l.b16 %v693
        %v732 = vunpack.c.l.b16 %v694
        %v733 = vpack.c.b16 %v718, %v717
        %v734 = vpack.c.b16 %v720, %v719
        %v735 = vpack.c.b16 %v722, %v721
        %v736 = vpack.c.b16 %v724, %v723
        %v737 = vpack.c.b16 %v726, %v725
        %v738 = vpack.c.b16 %v728, %v727
        %v739 = vpack.c.b16 %v730, %v729
        %v740 = vpack.c.b16 %v732, %v731
        %749 = vmatprep.subr.bf16.mxu0 0
        %750 = vmatpush1.bf16.msra.mxu0 %v740
        %751 = vmatprep.subr.bf16.mxu0 0
        %752 = vmatpush1.bf16.msra.mxu0 %v739
        %753 = vmatprep.subr.bf16.mxu0 0
        %754 = vmatpush1.bf16.msra.mxu0 %v738
        %755 = vmatprep.subr.bf16.mxu0 0
        %756 = vmatpush1.bf16.msra.mxu0 %v737
        %757 = vmatprep.subr.bf16.mxu0 0
        %758 = vmatpush1.bf16.msra.mxu0 %v736
        %759 = vmatprep.subr.bf16.mxu0 0
        %760 = vmatpush1.bf16.msra.mxu0 %v735
        %761 = vmatprep.subr.bf16.mxu0 0
        %762 = vmatpush1.bf16.msra.mxu0 %v734
        %763 = vmatprep.subr.bf16.mxu0 0
        %764 = vmatpush1.bf16.msra.mxu0 %v733
        %765 = vmatprep.subr.bf16.mxu0 0
        %766 = vmatpush2.bf16.msra.mxu0 0
        %767 = vmatprep.subr.bf16.mxu0 0
        %768 = vmatpush2.bf16.msra.mxu0 0
        %769 = vmatprep.subr.bf16.mxu0 0
        %770 = vmatpush2.bf16.msra.mxu0 0
        %771 = vmatprep.subr.bf16.mxu0 0
        %772 = vmatpush2.bf16.msra.mxu0 0
        %773 = vmatprep.subr.bf16.mxu0 0
        %774 = vmatpush2.bf16.msra.mxu0 0
        %775 = vmatprep.subr.bf16.mxu0 0
        %776 = vmatpush2.bf16.msra.mxu0 0
        %777 = vmatprep.subr.bf16.mxu0 0
        %778 = vmatpush2.bf16.msra.mxu0 0
        %779 = vmatprep.subr.bf16.mxu0 0
        %780 = vmatpush2.bf16.msra.mxu0 0
        %781 = vmatprep.mubr.bf16.mxu0 0
        %782 = vmatmul.mubr.bf16.gmra.mxu0 %v699
        %v783 = vpop.f32.mrf.mxu0
        %v784 = vadd.f32 0.0, %v783
        %v785 = vpop.f32.mrf.mxu0
        %v786 = vpop.f32.mrf.mxu0
        %v787 = vadd.f32 0.0, %v786
        %v788 = vpop.f32.mrf.mxu0
        %789 = vdwg.mxu0
        %v790 = vadd.f32 %v674, %v784
        %v791 = vadd.f32 %v674, %v787
        %v792 = vld [vmem:[#allocation2] sm:$0xf]
        %v793 = vld [vmem:[#allocation2 + $0x4] sm:$0xf]
        %v794 = vld [vmem:[#allocation2 + $0x8] sm:$0x1]
        %s795 = scalar_lea.vmem [#allocation3], 256
        %v796 = vld [vmem:[%s795] sm:$0xf]
        %v797 = vld [vmem:[%s795 + $0x4] sm:$0xf]
        %v798 = vld [vmem:[%s795 + $0x8] sm:$0xf]
        %v799 = vld [vmem:[%s795 + $0xc] sm:$0xf]
        %v800 = vld [vmem:[%s795 + $0x10] sm:$0xf]
        %v801 = vld [vmem:[%s795 + $0x14] sm:$0xf]
        %v802 = vld [vmem:[%s795 + $0x18] sm:$0xf]
        %v803 = vld [vmem:[%s795 + $0x1c] sm:$0xf]
        %v804 = vld [vmem:[%s795 + $0x20] sm:$0xf]
        %v805 = vld [vmem:[%s795 + $0x24] sm:$0xf]
        %v806 = vld [vmem:[%s795 + $0x28] sm:$0xf]
        %v807 = vld [vmem:[%s795 + $0x2c] sm:$0xf]
        %v808 = vld [vmem:[%s795 + $0x30] sm:$0xf]
        %v809 = vld [vmem:[%s795 + $0x34] sm:$0xf]
        %v810 = vld [vmem:[%s795 + $0x38] sm:$0xf]
        %v811 = vld [vmem:[%s795 + $0x3c] sm:$0xf]
        %v815 = vunpack.c.l.b16 %v792
        %v816 = vunpack.c.l.b16 %v793
        %v817 = vunpack.c.l.b16 %v794
        %v818 = vpack.c.b16 %v816, %v815
        %v819 = vpack.c.b16 %v817, %v817
        %v821 = vshrl.u32 %v818, 16
        %v823 = vshll.u32 %v818, 16
        %v825 = vrot.slane %v823, 1
        %v826 = vor.u32 %v821, %v825
        %v828 = vshll.u32 %v819, 16
        %v830 = vrot.slane %v828, 1
        %v831 = vsel %vm412, %v826, %v830
        %v849 = vunpack.c.l.b16 %v796
        %v850 = vunpack.c.l.b16 %v797
        %v851 = vunpack.c.l.b16 %v798
        %v852 = vunpack.c.l.b16 %v799
        %v853 = vunpack.c.l.b16 %v800
        %v854 = vunpack.c.l.b16 %v801
        %v855 = vunpack.c.l.b16 %v802
        %v856 = vunpack.c.l.b16 %v803
        %v857 = vunpack.c.l.b16 %v804
        %v858 = vunpack.c.l.b16 %v805
        %v859 = vunpack.c.l.b16 %v806
        %v860 = vunpack.c.l.b16 %v807
        %v861 = vunpack.c.l.b16 %v808
        %v862 = vunpack.c.l.b16 %v809
        %v863 = vunpack.c.l.b16 %v810
        %v864 = vunpack.c.l.b16 %v811
        %v865 = vpack.c.b16 %v850, %v849
        %v866 = vpack.c.b16 %v852, %v851
        %v867 = vpack.c.b16 %v854, %v853
        %v868 = vpack.c.b16 %v856, %v855
        %v869 = vpack.c.b16 %v858, %v857
        %v870 = vpack.c.b16 %v860, %v859
        %v871 = vpack.c.b16 %v862, %v861
        %v872 = vpack.c.b16 %v864, %v863
        %881 = vmatprep.subr.bf16.mxu0 0
        %882 = vmatpush1.bf16.msra.mxu0 %v872
        %883 = vmatprep.subr.bf16.mxu0 0
        %884 = vmatpush1.bf16.msra.mxu0 %v871
        %885 = vmatprep.subr.bf16.mxu0 0
        %886 = vmatpush1.bf16.msra.mxu0 %v870
        %887 = vmatprep.subr.bf16.mxu0 0
        %888 = vmatpush1.bf16.msra.mxu0 %v869
        %889 = vmatprep.subr.bf16.mxu0 0
        %890 = vmatpush1.bf16.msra.mxu0 %v868
        %891 = vmatprep.subr.bf16.mxu0 0
        %892 = vmatpush1.bf16.msra.mxu0 %v867
        %893 = vmatprep.subr.bf16.mxu0 0
        %894 = vmatpush1.bf16.msra.mxu0 %v866
        %895 = vmatprep.subr.bf16.mxu0 0
        %896 = vmatpush1.bf16.msra.mxu0 %v865
        %897 = vmatprep.subr.bf16.mxu0 0
        %898 = vmatpush2.bf16.msra.mxu0 0
        %899 = vmatprep.subr.bf16.mxu0 0
        %900 = vmatpush2.bf16.msra.mxu0 0
        %901 = vmatprep.subr.bf16.mxu0 0
        %902 = vmatpush2.bf16.msra.mxu0 0
        %903 = vmatprep.subr.bf16.mxu0 0
        %904 = vmatpush2.bf16.msra.mxu0 0
        %905 = vmatprep.subr.bf16.mxu0 0
        %906 = vmatpush2.bf16.msra.mxu0 0
        %907 = vmatprep.subr.bf16.mxu0 0
        %908 = vmatpush2.bf16.msra.mxu0 0
        %909 = vmatprep.subr.bf16.mxu0 0
        %910 = vmatpush2.bf16.msra.mxu0 0
        %911 = vmatprep.subr.bf16.mxu0 0
        %912 = vmatpush2.bf16.msra.mxu0 0
        %913 = vmatprep.mubr.bf16.mxu0 0
        %914 = vmatmul.mubr.bf16.gmra.mxu0 %v831
        %v915 = vpop.f32.mrf.mxu0
        %v916 = vadd.f32 0.0, %v915
        %v917 = vpop.f32.mrf.mxu0
        %v918 = vpop.f32.mrf.mxu0
        %v919 = vadd.f32 0.0, %v918
        %v920 = vpop.f32.mrf.mxu0
        %921 = vdwg.mxu0
        %v922 = vadd.f32 %v790, %v916
        %v923 = vadd.f32 %v791, %v919
        %v924 = vld [vmem:[#allocation2] sm:$0xe]
        %s925 = scalar_lea.vmem [#allocation3], 320
        %v926 = vld [vmem:[%s925] sm:$0xf]
        %v927 = vld [vmem:[%s925 + $0x4] sm:$0xf]
        %v928 = vld [vmem:[%s925 + $0x8] sm:$0xf]
        %v929 = vld [vmem:[%s925 + $0xc] sm:$0xf]
        %v930 = vld [vmem:[%s925 + $0x10] sm:$0xf]
        %v931 = vld [vmem:[%s925 + $0x14] sm:$0xf]
        %v932 = vld [vmem:[%s925 + $0x18] sm:$0xf]
        %v933 = vld [vmem:[%s925 + $0x1c] sm:$0xf]
        %v934 = vld [vmem:[%s925 + $0x20] sm:$0xf]
        %v935 = vld [vmem:[%s925 + $0x24] sm:$0xf]
        %v936 = vld [vmem:[%s925 + $0x28] sm:$0xf]
        %v937 = vld [vmem:[%s925 + $0x2c] sm:$0xf]
        %v938 = vld [vmem:[%s925 + $0x30] sm:$0xf]
        %v939 = vld [vmem:[%s925 + $0x34] sm:$0xf]
        %v940 = vld [vmem:[%s925 + $0x38] sm:$0xf]
        %v941 = vld [vmem:[%s925 + $0x3c] sm:$0xf]
        %v943 = vunpack.c.l.b16 %v924
        %v944 = vpack.c.b16 %v816, %v943
        %v945 = vrot.slane %v944, 1
        %v946 = vrot.slane %v819, 1
        %v947 = vsel %vm538, %v945, %v946
        %v965 = vunpack.c.l.b16 %v926
        %v966 = vunpack.c.l.b16 %v927
        %v967 = vunpack.c.l.b16 %v928
        %v968 = vunpack.c.l.b16 %v929
        %v969 = vunpack.c.l.b16 %v930
        %v970 = vunpack.c.l.b16 %v931
        %v971 = vunpack.c.l.b16 %v932
        %v972 = vunpack.c.l.b16 %v933
        %v973 = vunpack.c.l.b16 %v934
        %v974 = vunpack.c.l.b16 %v935
        %v975 = vunpack.c.l.b16 %v936
        %v976 = vunpack.c.l.b16 %v937
        %v977 = vunpack.c.l.b16 %v938
        %v978 = vunpack.c.l.b16 %v939
        %v979 = vunpack.c.l.b16 %v940
        %v980 = vunpack.c.l.b16 %v941
        %v981 = vpack.c.b16 %v966, %v965
        %v982 = vpack.c.b16 %v968, %v967
        %v983 = vpack.c.b16 %v970, %v969
        %v984 = vpack.c.b16 %v972, %v971
        %v985 = vpack.c.b16 %v974, %v973
        %v986 = vpack.c.b16 %v976, %v975
        %v987 = vpack.c.b16 %v978, %v977
        %v988 = vpack.c.b16 %v980, %v979
        %997 = vmatprep.subr.bf16.mxu0 0
        %998 = vmatpush1.bf16.msra.mxu0 %v988
        %999 = vmatprep.subr.bf16.mxu0 0
        %1000 = vmatpush1.bf16.msra.mxu0 %v987
        %1001 = vmatprep.subr.bf16.mxu0 0
        %1002 = vmatpush1.bf16.msra.mxu0 %v986
        %1003 = vmatprep.subr.bf16.mxu0 0
        %1004 = vmatpush1.bf16.msra.mxu0 %v985
        %1005 = vmatprep.subr.bf16.mxu0 0
        %1006 = vmatpush1.bf16.msra.mxu0 %v984
        %1007 = vmatprep.subr.bf16.mxu0 0
        %1008 = vmatpush1.bf16.msra.mxu0 %v983
        %1009 = vmatprep.subr.bf16.mxu0 0
        %1010 = vmatpush1.bf16.msra.mxu0 %v982
        %1011 = vmatprep.subr.bf16.mxu0 0
        %1012 = vmatpush1.bf16.msra.mxu0 %v981
        %1013 = vmatprep.subr.bf16.mxu0 0
        %1014 = vmatpush2.bf16.msra.mxu0 0
        %1015 = vmatprep.subr.bf16.mxu0 0
        %1016 = vmatpush2.bf16.msra.mxu0 0
        %1017 = vmatprep.subr.bf16.mxu0 0
        %1018 = vmatpush2.bf16.msra.mxu0 0
        %1019 = vmatprep.subr.bf16.mxu0 0
        %1020 = vmatpush2.bf16.msra.mxu0 0
        %1021 = vmatprep.subr.bf16.mxu0 0
        %1022 = vmatpush2.bf16.msra.mxu0 0
        %1023 = vmatprep.subr.bf16.mxu0 0
        %1024 = vmatpush2.bf16.msra.mxu0 0
        %1025 = vmatprep.subr.bf16.mxu0 0
        %1026 = vmatpush2.bf16.msra.mxu0 0
        %1027 = vmatprep.subr.bf16.mxu0 0
        %1028 = vmatpush2.bf16.msra.mxu0 0
        %1029 = vmatprep.mubr.bf16.mxu0 0
        %1030 = vmatmul.mubr.bf16.gmra.mxu0 %v947
        %v1031 = vpop.f32.mrf.mxu0
        %v1032 = vadd.f32 0.0, %v1031
        %v1033 = vpop.f32.mrf.mxu0
        %v1034 = vpop.f32.mrf.mxu0
        %v1035 = vadd.f32 0.0, %v1034
        %v1036 = vpop.f32.mrf.mxu0
        %1037 = vdwg.mxu0
        %v1038 = vadd.f32 %v922, %v1032
        %v1039 = vadd.f32 %v923, %v1035
        %v1040 = vmax.f32 %v1038, 0.0
        %v1041 = vmax.f32 %v1039, 0.0
        %v1042 = vpack.c.bf16 %v1041, %v1040
        %v1044 = vunpack.c.l.b16 %v1042
        %v1045 = vunpack.c.h.b16 %v1042
        %v1046 = vpack.c.b16 %v1044, %v1044
        %v1047 = vpack.c.b16 %v1045, %v1045
        %v1049 = vshrl.u32 %v1046, 16
        %v1051 = vrot.slane %v1049, 7
        %v1052 = vshll.u32 %v1046, 16
        %v1054 = vor.u32 %v1051, %v1052
        %v1055 = vrot.slane %v1051, 4
        %v1057 = vshrl.u32 %v1047, 16
        %v1059 = vrot.slane %v1057, 7
        %v1060 = vshll.u32 %v1047, 16
        %v1062 = vor.u32 %v1059, %v1060
        %v1063 = vsel %vm229, %v1055, %v1062
        %v1064 = vrot.slane %v1059, 4
        %v1068 = vsel %vm252, %v1054, %v792
        %1069 = vst [vmem:[#allocation2] sm:$0xf] %v1068
        %1070 = vst [vmem:[#allocation2 + $0x4] sm:$0xf] %v1063
        %v1071 = vld [vmem:[#allocation2 + $0x8] sm:$0x1]
        %v1072 = vsel %vm258, %v1064, %v1071
        %1073 = vst [vmem:[#allocation2 + $0x8] sm:$0x1] %v1072
        %s1074 = scalar_lea.vmem %s2, 2
        %v1075 = vld [vmem:[%s1074] sm:$0x1]
        %v1077 = vlaneseq
        %v1078 = vshrl.u32 %v1077, 7
        %v1079 = vsub.s32 0, %v1078
        %v1080 = vrot.slane %v1075, %v1079
        %v1082 = vld [vmem:[#allocation2] sm:$0xf]
        %v1083 = vld [vmem:[#allocation2 + $0x4] sm:$0xf]
        %s1084 = scalar_lea.vmem [#allocation3], 384
        %v1085 = vld [vmem:[%s1084] sm:$0xf]
        %v1086 = vld [vmem:[%s1084 + $0x4] sm:$0xf]
        %v1087 = vld [vmem:[%s1084 + $0x8] sm:$0xf]
        %v1088 = vld [vmem:[%s1084 + $0xc] sm:$0xf]
        %v1089 = vld [vmem:[%s1084 + $0x10] sm:$0xf]
        %v1090 = vld [vmem:[%s1084 + $0x14] sm:$0xf]
        %v1091 = vld [vmem:[%s1084 + $0x18] sm:$0xf]
        %v1092 = vld [vmem:[%s1084 + $0x1c] sm:$0xf]
        %v1093 = vld [vmem:[%s1084 + $0x20] sm:$0xf]
        %v1094 = vld [vmem:[%s1084 + $0x24] sm:$0xf]
        %v1095 = vld [vmem:[%s1084 + $0x28] sm:$0xf]
        %v1096 = vld [vmem:[%s1084 + $0x2c] sm:$0xf]
        %v1097 = vld [vmem:[%s1084 + $0x30] sm:$0xf]
        %v1098 = vld [vmem:[%s1084 + $0x34] sm:$0xf]
        %v1099 = vld [vmem:[%s1084 + $0x38] sm:$0xf]
        %v1100 = vld [vmem:[%s1084 + $0x3c] sm:$0xf]
        %v1103 = vunpack.c.l.b16 %v1082
        %v1104 = vunpack.c.l.b16 %v1083
        %v1105 = vpack.c.b16 %v1104, %v1103
        %v1123 = vunpack.c.l.b16 %v1085
        %v1124 = vunpack.c.l.b16 %v1086
        %v1125 = vunpack.c.l.b16 %v1087
        %v1126 = vunpack.c.l.b16 %v1088
        %v1127 = vunpack.c.l.b16 %v1089
        %v1128 = vunpack.c.l.b16 %v1090
        %v1129 = vunpack.c.l.b16 %v1091
        %v1130 = vunpack.c.l.b16 %v1092
        %v1131 = vunpack.c.l.b16 %v1093
        %v1132 = vunpack.c.l.b16 %v1094
        %v1133 = vunpack.c.l.b16 %v1095
        %v1134 = vunpack.c.l.b16 %v1096
        %v1135 = vunpack.c.l.b16 %v1097
        %v1136 = vunpack.c.l.b16 %v1098
        %v1137 = vunpack.c.l.b16 %v1099
        %v1138 = vunpack.c.l.b16 %v1100
        %v1139 = vpack.c.b16 %v1124, %v1123
        %v1140 = vpack.c.b16 %v1126, %v1125
        %v1141 = vpack.c.b16 %v1128, %v1127
        %v1142 = vpack.c.b16 %v1130, %v1129
        %v1143 = vpack.c.b16 %v1132, %v1131
        %v1144 = vpack.c.b16 %v1134, %v1133
        %v1145 = vpack.c.b16 %v1136, %v1135
        %v1146 = vpack.c.b16 %v1138, %v1137
        %1155 = vmatprep.subr.bf16.mxu0 0
        %1156 = vmatpush1.bf16.msra.mxu0 %v1146
        %1157 = vmatprep.subr.bf16.mxu0 0
        %1158 = vmatpush1.bf16.msra.mxu0 %v1145
        %1159 = vmatprep.subr.bf16.mxu0 0
        %1160 = vmatpush1.bf16.msra.mxu0 %v1144
        %1161 = vmatprep.subr.bf16.mxu0 0
        %1162 = vmatpush1.bf16.msra.mxu0 %v1143
        %1163 = vmatprep.subr.bf16.mxu0 0
        %1164 = vmatpush1.bf16.msra.mxu0 %v1142
        %1165 = vmatprep.subr.bf16.mxu0 0
        %1166 = vmatpush1.bf16.msra.mxu0 %v1141
        %1167 = vmatprep.subr.bf16.mxu0 0
        %1168 = vmatpush1.bf16.msra.mxu0 %v1140
        %1169 = vmatprep.subr.bf16.mxu0 0
        %1170 = vmatpush1.bf16.msra.mxu0 %v1139
        %1171 = vmatprep.subr.bf16.mxu0 0
        %1172 = vmatpush2.bf16.msra.mxu0 0
        %1173 = vmatprep.subr.bf16.mxu0 0
        %1174 = vmatpush2.bf16.msra.mxu0 0
        %1175 = vmatprep.subr.bf16.mxu0 0
        %1176 = vmatpush2.bf16.msra.mxu0 0
        %1177 = vmatprep.subr.bf16.mxu0 0
        %1178 = vmatpush2.bf16.msra.mxu0 0
        %1179 = vmatprep.subr.bf16.mxu0 0
        %1180 = vmatpush2.bf16.msra.mxu0 0
        %1181 = vmatprep.subr.bf16.mxu0 0
        %1182 = vmatpush2.bf16.msra.mxu0 0
        %1183 = vmatprep.subr.bf16.mxu0 0
        %1184 = vmatpush2.bf16.msra.mxu0 0
        %1185 = vmatprep.subr.bf16.mxu0 0
        %1186 = vmatpush2.bf16.msra.mxu0 0
        %1187 = vmatprep.mubr.bf16.mxu0 0
        %1188 = vmatmul.mubr.bf16.gmra.mxu0 %v1105
        %v1189 = vpop.f32.mrf.mxu0
        %v1190 = vadd.f32 0.0, %v1189
        %v1191 = vpop.f32.mrf.mxu0
        %v1192 = vpop.f32.mrf.mxu0
        %v1193 = vadd.f32 0.0, %v1192
        %v1194 = vpop.f32.mrf.mxu0
        %1195 = vdwg.mxu0
        %v1196 = vadd.f32 %v1080, %v1190
        %v1197 = vadd.f32 %v1080, %v1193
        %v1198 = vld [vmem:[#allocation2] sm:$0xf]
        %v1199 = vld [vmem:[#allocation2 + $0x4] sm:$0xf]
        %v1200 = vld [vmem:[#allocation2 + $0x8] sm:$0x1]
        %s1201 = scalar_lea.vmem [#allocation3], 448
        %v1202 = vld [vmem:[%s1201] sm:$0xf]
        %v1203 = vld [vmem:[%s1201 + $0x4] sm:$0xf]
        %v1204 = vld [vmem:[%s1201 + $0x8] sm:$0xf]
        %v1205 = vld [vmem:[%s1201 + $0xc] sm:$0xf]
        %v1206 = vld [vmem:[%s1201 + $0x10] sm:$0xf]
        %v1207 = vld [vmem:[%s1201 + $0x14] sm:$0xf]
        %v1208 = vld [vmem:[%s1201 + $0x18] sm:$0xf]
        %v1209 = vld [vmem:[%s1201 + $0x1c] sm:$0xf]
        %v1210 = vld [vmem:[%s1201 + $0x20] sm:$0xf]
        %v1211 = vld [vmem:[%s1201 + $0x24] sm:$0xf]
        %v1212 = vld [vmem:[%s1201 + $0x28] sm:$0xf]
        %v1213 = vld [vmem:[%s1201 + $0x2c] sm:$0xf]
        %v1214 = vld [vmem:[%s1201 + $0x30] sm:$0xf]
        %v1215 = vld [vmem:[%s1201 + $0x34] sm:$0xf]
        %v1216 = vld [vmem:[%s1201 + $0x38] sm:$0xf]
        %v1217 = vld [vmem:[%s1201 + $0x3c] sm:$0xf]
        %v1221 = vunpack.c.l.b16 %v1198
        %v1222 = vunpack.c.l.b16 %v1199
        %v1223 = vunpack.c.l.b16 %v1200
        %v1224 = vpack.c.b16 %v1222, %v1221
        %v1225 = vpack.c.b16 %v1223, %v1223
        %v1227 = vshrl.u32 %v1224, 16
        %v1229 = vshll.u32 %v1224, 16
        %v1231 = vrot.slane %v1229, 1
        %v1232 = vor.u32 %v1227, %v1231
        %v1234 = vshll.u32 %v1225, 16
        %v1236 = vrot.slane %v1234, 1
        %v1237 = vsel %vm412, %v1232, %v1236
        %v1255 = vunpack.c.l.b16 %v1202
        %v1256 = vunpack.c.l.b16 %v1203
        %v1257 = vunpack.c.l.b16 %v1204
        %v1258 = vunpack.c.l.b16 %v1205
        %v1259 = vunpack.c.l.b16 %v1206
        %v1260 = vunpack.c.l.b16 %v1207
        %v1261 = vunpack.c.l.b16 %v1208
        %v1262 = vunpack.c.l.b16 %v1209
        %v1263 = vunpack.c.l.b16 %v1210
        %v1264 = vunpack.c.l.b16 %v1211
        %v1265 = vunpack.c.l.b16 %v1212
        %v1266 = vunpack.c.l.b16 %v1213
        %v1267 = vunpack.c.l.b16 %v1214
        %v1268 = vunpack.c.l.b16 %v1215
        %v1269 = vunpack.c.l.b16 %v1216
        %v1270 = vunpack.c.l.b16 %v1217
        %v1271 = vpack.c.b16 %v1256, %v1255
        %v1272 = vpack.c.b16 %v1258, %v1257
        %v1273 = vpack.c.b16 %v1260, %v1259
        %v1274 = vpack.c.b16 %v1262, %v1261
        %v1275 = vpack.c.b16 %v1264, %v1263
        %v1276 = vpack.c.b16 %v1266, %v1265
        %v1277 = vpack.c.b16 %v1268, %v1267
        %v1278 = vpack.c.b16 %v1270, %v1269
        %1287 = vmatprep.subr.bf16.mxu0 0
        %1288 = vmatpush1.bf16.msra.mxu0 %v1278
        %1289 = vmatprep.subr.bf16.mxu0 0
        %1290 = vmatpush1.bf16.msra.mxu0 %v1277
        %1291 = vmatprep.subr.bf16.mxu0 0
        %1292 = vmatpush1.bf16.msra.mxu0 %v1276
        %1293 = vmatprep.subr.bf16.mxu0 0
        %1294 = vmatpush1.bf16.msra.mxu0 %v1275
        %1295 = vmatprep.subr.bf16.mxu0 0
        %1296 = vmatpush1.bf16.msra.mxu0 %v1274
        %1297 = vmatprep.subr.bf16.mxu0 0
        %1298 = vmatpush1.bf16.msra.mxu0 %v1273
        %1299 = vmatprep.subr.bf16.mxu0 0
        %1300 = vmatpush1.bf16.msra.mxu0 %v1272
        %1301 = vmatprep.subr.bf16.mxu0 0
        %1302 = vmatpush1.bf16.msra.mxu0 %v1271
        %1303 = vmatprep.subr.bf16.mxu0 0
        %1304 = vmatpush2.bf16.msra.mxu0 0
        %1305 = vmatprep.subr.bf16.mxu0 0
        %1306 = vmatpush2.bf16.msra.mxu0 0
        %1307 = vmatprep.subr.bf16.mxu0 0
        %1308 = vmatpush2.bf16.msra.mxu0 0
        %1309 = vmatprep.subr.bf16.mxu0 0
        %1310 = vmatpush2.bf16.msra.mxu0 0
        %1311 = vmatprep.subr.bf16.mxu0 0
        %1312 = vmatpush2.bf16.msra.mxu0 0
        %1313 = vmatprep.subr.bf16.mxu0 0
        %1314 = vmatpush2.bf16.msra.mxu0 0
        %1315 = vmatprep.subr.bf16.mxu0 0
        %1316 = vmatpush2.bf16.msra.mxu0 0
        %1317 = vmatprep.subr.bf16.mxu0 0
        %1318 = vmatpush2.bf16.msra.mxu0 0
        %1319 = vmatprep.mubr.bf16.mxu0 0
        %1320 = vmatmul.mubr.bf16.gmra.mxu0 %v1237
        %v1321 = vpop.f32.mrf.mxu0
        %v1322 = vadd.f32 0.0, %v1321
        %v1323 = vpop.f32.mrf.mxu0
        %v1324 = vpop.f32.mrf.mxu0
        %v1325 = vadd.f32 0.0, %v1324
        %v1326 = vpop.f32.mrf.mxu0
        %1327 = vdwg.mxu0
        %v1328 = vadd.f32 %v1196, %v1322
        %v1329 = vadd.f32 %v1197, %v1325
        %v1330 = vld [vmem:[#allocation2] sm:$0xe]
        %s1331 = scalar_lea.vmem [#allocation3], 512
        %v1332 = vld [vmem:[%s1331] sm:$0xf]
        %v1333 = vld [vmem:[%s1331 + $0x4] sm:$0xf]
        %v1334 = vld [vmem:[%s1331 + $0x8] sm:$0xf]
        %v1335 = vld [vmem:[%s1331 + $0xc] sm:$0xf]
        %v1336 = vld [vmem:[%s1331 + $0x10] sm:$0xf]
        %v1337 = vld [vmem:[%s1331 + $0x14] sm:$0xf]
        %v1338 = vld [vmem:[%s1331 + $0x18] sm:$0xf]
        %v1339 = vld [vmem:[%s1331 + $0x1c] sm:$0xf]
        %v1340 = vld [vmem:[%s1331 + $0x20] sm:$0xf]
        %v1341 = vld [vmem:[%s1331 + $0x24] sm:$0xf]
        %v1342 = vld [vmem:[%s1331 + $0x28] sm:$0xf]
        %v1343 = vld [vmem:[%s1331 + $0x2c] sm:$0xf]
        %v1344 = vld [vmem:[%s1331 + $0x30] sm:$0xf]
        %v1345 = vld [vmem:[%s1331 + $0x34] sm:$0xf]
        %v1346 = vld [vmem:[%s1331 + $0x38] sm:$0xf]
        %v1347 = vld [vmem:[%s1331 + $0x3c] sm:$0xf]
        %v1349 = vunpack.c.l.b16 %v1330
        %v1350 = vpack.c.b16 %v1222, %v1349
        %v1351 = vrot.slane %v1350, 1
        %v1352 = vrot.slane %v1225, 1
        %v1353 = vsel %vm538, %v1351, %v1352
        %v1371 = vunpack.c.l.b16 %v1332
        %v1372 = vunpack.c.l.b16 %v1333
        %v1373 = vunpack.c.l.b16 %v1334
        %v1374 = vunpack.c.l.b16 %v1335
        %v1375 = vunpack.c.l.b16 %v1336
        %v1376 = vunpack.c.l.b16 %v1337
        %v1377 = vunpack.c.l.b16 %v1338
        %v1378 = vunpack.c.l.b16 %v1339
        %v1379 = vunpack.c.l.b16 %v1340
        %v1380 = vunpack.c.l.b16 %v1341
        %v1381 = vunpack.c.l.b16 %v1342
        %v1382 = vunpack.c.l.b16 %v1343
        %v1383 = vunpack.c.l.b16 %v1344
        %v1384 = vunpack.c.l.b16 %v1345
        %v1385 = vunpack.c.l.b16 %v1346
        %v1386 = vunpack.c.l.b16 %v1347
        %v1387 = vpack.c.b16 %v1372, %v1371
        %v1388 = vpack.c.b16 %v1374, %v1373
        %v1389 = vpack.c.b16 %v1376, %v1375
        %v1390 = vpack.c.b16 %v1378, %v1377
        %v1391 = vpack.c.b16 %v1380, %v1379
        %v1392 = vpack.c.b16 %v1382, %v1381
        %v1393 = vpack.c.b16 %v1384, %v1383
        %v1394 = vpack.c.b16 %v1386, %v1385
        %1403 = vmatprep.subr.bf16.mxu0 0
        %1404 = vmatpush1.bf16.msra.mxu0 %v1394
        %1405 = vmatprep.subr.bf16.mxu0 0
        %1406 = vmatpush1.bf16.msra.mxu0 %v1393
        %1407 = vmatprep.subr.bf16.mxu0 0
        %1408 = vmatpush1.bf16.msra.mxu0 %v1392
        %1409 = vmatprep.subr.bf16.mxu0 0
        %1410 = vmatpush1.bf16.msra.mxu0 %v1391
        %1411 = vmatprep.subr.bf16.mxu0 0
        %1412 = vmatpush1.bf16.msra.mxu0 %v1390
        %1413 = vmatprep.subr.bf16.mxu0 0
        %1414 = vmatpush1.bf16.msra.mxu0 %v1389
        %1415 = vmatprep.subr.bf16.mxu0 0
        %1416 = vmatpush1.bf16.msra.mxu0 %v1388
        %1417 = vmatprep.subr.bf16.mxu0 0
        %1418 = vmatpush1.bf16.msra.mxu0 %v1387
        %1419 = vmatprep.subr.bf16.mxu0 0
        %1420 = vmatpush2.bf16.msra.mxu0 0
        %1421 = vmatprep.subr.bf16.mxu0 0
        %1422 = vmatpush2.bf16.msra.mxu0 0
        %1423 = vmatprep.subr.bf16.mxu0 0
        %1424 = vmatpush2.bf16.msra.mxu0 0
        %1425 = vmatprep.subr.bf16.mxu0 0
        %1426 = vmatpush2.bf16.msra.mxu0 0
        %1427 = vmatprep.subr.bf16.mxu0 0
        %1428 = vmatpush2.bf16.msra.mxu0 0
        %1429 = vmatprep.subr.bf16.mxu0 0
        %1430 = vmatpush2.bf16.msra.mxu0 0
        %1431 = vmatprep.subr.bf16.mxu0 0
        %1432 = vmatpush2.bf16.msra.mxu0 0
        %1433 = vmatprep.subr.bf16.mxu0 0
        %1434 = vmatpush2.bf16.msra.mxu0 0
        %1435 = vmatprep.mubr.bf16.mxu0 0
        %1436 = vmatmul.mubr.bf16.gmra.mxu0 %v1353
        %v1437 = vpop.f32.mrf.mxu0
        %v1438 = vadd.f32 0.0, %v1437
        %v1439 = vpop.f32.mrf.mxu0
        %v1440 = vpop.f32.mrf.mxu0
        %v1441 = vadd.f32 0.0, %v1440
        %v1442 = vpop.f32.mrf.mxu0
        %1443 = vdwg.mxu0
        %v1444 = vadd.f32 %v1328, %v1438
        %v1445 = vadd.f32 %v1329, %v1441
        %v1446 = vmax.f32 %v1444, 0.0
        %v1447 = vmax.f32 %v1445, 0.0
        %1448 = vst [vmem:[%s185] sm:$0xff] %v1446
        %1449 = vst [vmem:[%s185 + $0x8] sm:$0xff] %v1447
        %p1450 = scmp.lt.s32.totalorder %s15, 1
        %s1451 = scalar_select %p1450, %s15, 1
        %s1452 = smul.addr %s1451, 2
        %s1453 = smul.addr %s1452, 8
        %s1454 = scalar_lea.vmem %s3, %s1453
        // Predicated region
        $region37: #{feature_encoder_forward.1} parent=31 // pred_check
          %p1455 = pneg %p101
        $region38: #{feature_encoder_forward.1} parent=31 // pred_check_branch
          %1457 = sbr.rel (%p1455) target = $region40
        $region39: #{feature_encoder_forward.1} parent=31 // pred_region
          _
        $region40: #{feature_encoder_forward.1} parent=31 // pred_fallthru
          _
      $region32: #{feature_encoder_forward.1} parent=5 // pred_fallthru
        _
      %p1458 = scmp.le.s32.totalorder 2, %s10
      // Predicated region
      $region41: #{feature_encoder_forward.1} parent=5 // pred_check
        %p1459 = pneg %p1458
      $region42: #{feature_encoder_forward.1} parent=5 // pred_check_branch
        %1461 = sbr.rel (%p1459) target = $region44
      $region43: #{feature_encoder_forward.1} parent=5 // pred_region
        %s1462 = ssub.s32 %s10, 2
        // Predicated region
        $region45: #{feature_encoder_forward.1} parent=43 // pred_check
          %p1463 = pneg %p107
        $region46: #{feature_encoder_forward.1} parent=43 // pred_check_branch
          %1465 = sbr.rel (%p1463) target = $region48
        $region47: #{feature_encoder_forward.1} parent=43 // pred_region
          %p1466 = scmp.lt.s32.totalorder %s16, 1
          %s1467 = scalar_select %p1466, %s16, 1
          %s1468 = smul.addr %s1467, 2
          %s1469 = smul.addr %s1468, 8
          %s1470 = scalar_lea.vmem %s3, %s1469
        $region48: #{feature_encoder_forward.1} parent=43 // pred_fallthru
          _
      $region44: #{feature_encoder_forward.1} parent=5 // pred_fallthru
        _
    $region6: #{feature_encoder_forward.1} parent=1 // loop_footer
      %s14 = sadd.s32 1, %s10
    $region7: #{feature_encoder_forward.1} parent=1 // loop_footer_branch
      %9 = sbr.rel target = $region3
    $region8: #{feature_encoder_forward.1} parent=1 // loop_exit
      _
    %1471 = vsyncpa [#allocation4], 1
    %s1472 = scalar_lea.sflag [#allocation4], 1
    %1473 = vsyncpa %s1472, 1

</llo_original>
